<compile_context>
chip_gen: v7x
topology: tpu7x:2x2x1
jax: 0.10.0
libtpu: 0.0.40
codegen_flags: <defaults>
</compile_context>

<pallas_src>
import jax
import jax.numpy as jnp
import numpy as np
from jax import lax
from jax.experimental import pallas as pl
from jax.experimental.pallas import tpu as pltpu


def _round_up(x, m):
    return (x + m - 1) // m * m


def _make_kernel(ROWS, W, Wp, H, use_strided):
    six_rows = 6 * ROWS

    def kernel(x_ref, sel_ref, b_ref, o_ref):
        # x_ref:  (6*ROWS, W) VMEM   (squeezed block of x, rows 6*ROWS*r ..)
        # sel_ref:(3, W, 2*Wp) VMEM  sel[kh, 6*wp+3*pw+kw, pw*Wp+wp] = w[kh, kw]
        # b_ref:  (1,) SMEM          o_ref: (ROWS, Wp) VMEM
        bias = b_ref[0]

        if not use_strided:
            xb = x_ref[...]                                          # (6R, W)
            # The last row tile may overrun H; Pallas pads it with unspecified
            # values.  Zero them so 0 * garbage cannot poison the matmuls.
            r = pl.program_id(1)
            row_id = lax.broadcasted_iota(jnp.int32, (six_rows, W), 0)
            xb = jnp.where(row_id < (H - six_rows * r), xb, 0.0)
            out_id = lax.broadcasted_iota(jnp.int32, (ROWS, six_rows), 0)
            col_id = lax.broadcasted_iota(jnp.int32, (ROWS, six_rows), 1)

        pooled = None
        for ph in range(2):                      # pool-window row (0 or 1)
            acc = jnp.zeros((ROWS, 2 * Wp), jnp.float32)
            for kh in range(3):                  # conv tap row
                off = 3 * ph + kh                # input row = 6*hp + off
                if use_strided:
                    rows = x_ref[pl.ds(off, ROWS, stride=6), :]      # (ROWS, W)
                else:
                    sel_rows = (col_id == 6 * out_id + off).astype(jnp.float32)
                    rows = jnp.dot(sel_rows, xb,
                                   preferred_element_type=jnp.float32)
                # MXU does the lane regrouping + kw-weighted sum:
                # columns [0:Wp] are pw=0, [Wp:2Wp] are pw=1.
                acc = acc + jnp.dot(rows, sel_ref[kh],
                                    preferred_element_type=jnp.float32)
            z = jnp.maximum(acc + bias, 0.0)                          # bias+ReLU
            m = jnp.maximum(z[:, :Wp], z[:, Wp:])                     # pool cols
            pooled = m if pooled is None else jnp.maximum(pooled, m)  # pool rows
        o_ref[...] = pooled

    return kernel


def _forward(x, weight, bias, *, rows_cap=256, use_strided=True):
    N, C, H, W = x.shape
    assert C == 1
    Ho, Wo = (H - 3) // 3 + 1, (W - 3) // 3 + 1      # conv output spatial dims
    Hp, Wp = Ho // 2, Wo // 2                        # max-pool output dims
    M = N * Hp * Wp
    if M == 0:
        return jnp.zeros((0,), jnp.float32)

    x = x.astype(jnp.float32)
    w33 = weight.reshape(3, 3).astype(jnp.float32)
    b1 = bias.reshape(1).astype(jnp.float32)

    # Pooled rows per grid step.  6*ROWS input rows per block (multiple of 8
    # sublanes); size the tile to ~1 MiB of x so per-step overhead is amortized.
    target_bytes = 1 << 20
    cap = min(rows_cap, target_bytes // (24 * W))
    ROWS = max(4, min(_round_up(Hp, 4), (cap // 4) * 4))
    RT = pl.cdiv(Hp, ROWS)

    # Column-regrouping matrices (tiny, built once from static shape info):
    # sel[kh, 6*wp + 3*pw + kw, pw*Wp + wp] = w[kh, kw].
    mask = np.zeros((3, W, 2 * Wp), np.float32)
    wp_idx = np.arange(Wp)
    for kw in range(3):
        for pw in range(2):
            mask[kw, 6 * wp_idx + 3 * pw + kw, pw * Wp + wp_idx] = 1.0
    sel = jnp.einsum("hk,kwc->hwc", w33, jnp.asarray(mask))          # (3, W, 2*Wp)

    kernel = _make_kernel(ROWS, W, Wp, H, use_strided)
    out4 = pl.pallas_call(
        kernel,
        out_shape=jax.ShapeDtypeStruct((N, RT, ROWS, Wp), jnp.float32),
        grid=(N, RT),
        in_specs=[
            # x read straight from HBM in row tiles (no wrapper copy).
            pl.BlockSpec((None, None, 6 * ROWS, W), lambda n, r: (n, 0, r, 0)),
            # Small weight/selection matrices, constant across the grid.
            pl.BlockSpec((3, W, 2 * Wp), lambda n, r: (0, 0, 0)),
            # Bias scalar in SMEM.
            pl.BlockSpec(memory_space=pltpu.MemorySpace.SMEM),
        ],
        out_specs=pl.BlockSpec((None, None, ROWS, Wp), lambda n, r: (n, r, 0, 0)),
        compiler_params=pltpu.CompilerParams(
            dimension_semantics=("parallel", "parallel"),  # megacore split (v7x)
        ),
        cost_estimate=pl.CostEstimate(
            flops=24 * N * RT * ROWS * W * Wp,
            transcendentals=0,
            bytes_accessed=N * RT * 6 * ROWS * W * 4 + sel.size * 4 + M * 4,
        ),
    )(x, sel, b1)

    # (N, RT, ROWS, Wp) -> (N, Hp, Wp) -> flat; identical to PyTorch .view(-1).
    return out4.reshape(N, RT * ROWS, Wp)[:, :Hp, :].reshape(-1)


def test_conv_forward(x, weight, bias, *, rows_cap=256):
    """x: (N, 1, H, W) float32 (NCHW); weight: (1, 1, 3, 3); bias: (1,)."""
    try:
        return _forward(x, weight, bias, rows_cap=rows_cap, use_strided=True)
    except Exception:
        # Robustness fallback for Mosaic versions without strided vector loads.
        return _forward(x, weight, bias, rows_cap=rows_cap, use_strided=False)


def reference_forward(x, weight, bias):
    """Pure-JAX reference with the exact PyTorch semantics (NCHW conv + maxpool)."""
    y = lax.conv_general_dilated(
        x.astype(jnp.float32), weight.astype(jnp.float32),
        window_strides=(3, 3), padding="VALID",
        dimension_numbers=("NCHW", "OIHW", "NCHW"),
    ) + bias.reshape(1, -1, 1, 1)
    z = jnp.maximum(y, 0.0)
    p = lax.reduce_window(z, -jnp.inf, lax.max,
                          window_dimensions=(1, 1, 2, 2),
                          window_strides=(1, 1, 2, 2),
                          padding="VALID")
    return p.reshape(-1)


if __name__ == "__main__":
    key = jax.random.PRNGKey(0)
    kx, kw_, kb, kx2, kx3 = jax.random.split(key, 5)

    # Deterministic synthetic parameters (shapes from nn.Conv2d(1, 1, 3)).
    weight = 0.2 * jax.random.normal(kw_, (1, 1, 3, 3), dtype=jnp.float32)
    bias = 0.1 * jax.random.normal(kb, (1,), dtype=jnp.float32)

    # Small NCHW input: H = W = 18 -> conv 6x6 -> pool 3x3 -> flat length 18.
    x_small = jax.random.normal(kx, (2, 1, 18, 18), dtype=jnp.float32)
    # Larger case: H = W = 198 -> conv 66x66 -> pool 33x33 -> M = 4*33*33 = 4356.
    x_big = jax.random.normal(kx2, (4, 1, 198, 198), dtype=jnp.float32)
    # Ragged case: H, W not multiples of 6 (exercises unused-edge handling).
    x_ragged = jax.random.normal(kx3, (1, 1, 20, 23), dtype=jnp.float32)

    cases = [
        (x_small, {}),
        (x_big, {}),
        (x_big, {"rows_cap": 8}),   # multi row-tile grid + padded last tile
        (x_ragged, {}),
    ]
    for x, kwargs in cases:
        out = jax.block_until_ready(test_conv_forward(x, weight, bias, **kwargs))
        ref = reference_forward(x, weight, bias)
        assert out.shape == ref.shape, (out.shape, ref.shape)
        assert jnp.allclose(out, ref, atol=2e-5, rtol=2e-5), (
            float(jnp.max(jnp.abs(out - ref))))

    print("KERNEL_OK")
</pallas_src>

<mosaic_0001>
module attributes {stable_mosaic.version = 11 : i64} {
  func.func @kernel(%arg0: i32, %arg1: i32, %arg2: memref<1x1x24x18xf32, #tpu.memory_space<vmem>>, %arg3: memref<3x18x6xf32, #tpu.memory_space<vmem>>, %arg4: memref<1xf32, #tpu.memory_space<smem>>, %arg5: memref<1x1x4x3xf32, #tpu.memory_space<vmem>>) attributes {dimension_semantics = [#tpu.dimension_semantics<parallel>, #tpu.dimension_semantics<parallel>], iteration_bounds = array<i64: 2, 1>, scalar_prefetch = 0 : i64, scratch_operands = 0 : i64, tpu.core_type = #tpu.core_type<tc>, window_params = [{transform_indices = @transform_0, window_bounds = array<i64: 1, 1, 24, 18>}, {pipeline_mode = #tpu.pipeline_mode<synchronous>, transform_indices = @transform_1, window_bounds = array<i64: 3, 18, 6>}, {transform_indices = @transform_2, window_bounds = array<i64: 1>}, {transform_indices = @transform_3, window_bounds = array<i64: 1, 1, 4, 3>}]} {
    %c0 = arith.constant 0 : index
    %0 = memref.load %arg4[%c0] : memref<1xf32, #tpu.memory_space<smem>>
    %cst = arith.constant 0.000000e+00 : f32
    %1 = vector.broadcast %cst : f32 to vector<4x6xf32>
    %c0_0 = arith.constant 0 : index
    %c0_1 = arith.constant 0 : index
    %c0_2 = arith.constant 0 : index
    %c0_3 = arith.constant 0 : index
    %2 = tpu.strided_load %arg2[%c0_0, %c0_1, %c0_2, %c0_3] {strides = array<i32: 1, 1, 6, 1>} : memref<1x1x24x18xf32, #tpu.memory_space<vmem>>, vector<1x1x4x18xf32>
    %3 = vector.shape_cast %2 : vector<1x1x4x18xf32> to vector<4x18xf32>
    %c0_4 = arith.constant 0 : index
    %c0_5 = arith.constant 0 : index
    %c0_6 = arith.constant 0 : index
    %4 = vector.load %arg3[%c0_4, %c0_5, %c0_6] : memref<3x18x6xf32, #tpu.memory_space<vmem>>, vector<1x18x6xf32>
    %5 = vector.shape_cast %4 : vector<1x18x6xf32> to vector<18x6xf32>
    %cst_7 = arith.constant dense<0.000000e+00> : vector<4x6xf32>
    %6 = tpu.matmul %3, %5, %cst_7 {dimension_numbers = #tpu.dot_dimension_numbers<[1], [0], [0], [1], [0, 0, 1, 1], [], []>} : vector<4x18xf32>, vector<18x6xf32>, vector<4x6xf32> -> vector<4x6xf32>
    %7 = arith.addf %1, %6 : vector<4x6xf32>
    %c0_8 = arith.constant 0 : index
    %c0_9 = arith.constant 0 : index
    %c1 = arith.constant 1 : index
    %c0_10 = arith.constant 0 : index
    %8 = tpu.strided_load %arg2[%c0_8, %c0_9, %c1, %c0_10] {strides = array<i32: 1, 1, 6, 1>} : memref<1x1x24x18xf32, #tpu.memory_space<vmem>>, vector<1x1x4x18xf32>
    %9 = vector.shape_cast %8 : vector<1x1x4x18xf32> to vector<4x18xf32>
    %c1_11 = arith.constant 1 : index
    %c0_12 = arith.constant 0 : index
    %c0_13 = arith.constant 0 : index
    %10 = vector.load %arg3[%c1_11, %c0_12, %c0_13] : memref<3x18x6xf32, #tpu.memory_space<vmem>>, vector<1x18x6xf32>
    %11 = vector.shape_cast %10 : vector<1x18x6xf32> to vector<18x6xf32>
    %cst_14 = arith.constant dense<0.000000e+00> : vector<4x6xf32>
    %12 = tpu.matmul %9, %11, %cst_14 {dimension_numbers = #tpu.dot_dimension_numbers<[1], [0], [0], [1], [0, 0, 1, 1], [], []>} : vector<4x18xf32>, vector<18x6xf32>, vector<4x6xf32> -> vector<4x6xf32>
    %13 = arith.addf %7, %12 : vector<4x6xf32>
    %c0_15 = arith.constant 0 : index
    %c0_16 = arith.constant 0 : index
    %c2 = arith.constant 2 : index
    %c0_17 = arith.constant 0 : index
    %14 = tpu.strided_load %arg2[%c0_15, %c0_16, %c2, %c0_17] {strides = array<i32: 1, 1, 6, 1>} : memref<1x1x24x18xf32, #tpu.memory_space<vmem>>, vector<1x1x4x18xf32>
    %15 = vector.shape_cast %14 : vector<1x1x4x18xf32> to vector<4x18xf32>
    %c2_18 = arith.constant 2 : index
    %c0_19 = arith.constant 0 : index
    %c0_20 = arith.constant 0 : index
    %16 = vector.load %arg3[%c2_18, %c0_19, %c0_20] : memref<3x18x6xf32, #tpu.memory_space<vmem>>, vector<1x18x6xf32>
    %17 = vector.shape_cast %16 : vector<1x18x6xf32> to vector<18x6xf32>
    %cst_21 = arith.constant dense<0.000000e+00> : vector<4x6xf32>
    %18 = tpu.matmul %15, %17, %cst_21 {dimension_numbers = #tpu.dot_dimension_numbers<[1], [0], [0], [1], [0, 0, 1, 1], [], []>} : vector<4x18xf32>, vector<18x6xf32>, vector<4x6xf32> -> vector<4x6xf32>
    %19 = arith.addf %13, %18 : vector<4x6xf32>
    %20 = vector.broadcast %0 : f32 to vector<4x6xf32>
    %21 = arith.addf %19, %20 : vector<4x6xf32>
    %cst_22 = arith.constant 0.000000e+00 : f32
    %22 = vector.broadcast %cst_22 : f32 to vector<4x6xf32>
    %23 = arith.maximumf %21, %22 : vector<4x6xf32>
    %24 = vector.extract_strided_slice %23 {offsets = [0, 0], sizes = [4, 3], strides = [1, 1]} : vector<4x6xf32> to vector<4x3xf32>
    %25 = vector.extract_strided_slice %23 {offsets = [0, 3], sizes = [4, 3], strides = [1, 1]} : vector<4x6xf32> to vector<4x3xf32>
    %26 = arith.maximumf %24, %25 : vector<4x3xf32>
    %cst_23 = arith.constant 0.000000e+00 : f32
    %27 = vector.broadcast %cst_23 : f32 to vector<4x6xf32>
    %c0_24 = arith.constant 0 : index
    %c0_25 = arith.constant 0 : index
    %c3 = arith.constant 3 : index
    %c0_26 = arith.constant 0 : index
    %28 = tpu.strided_load %arg2[%c0_24, %c0_25, %c3, %c0_26] {strides = array<i32: 1, 1, 6, 1>} : memref<1x1x24x18xf32, #tpu.memory_space<vmem>>, vector<1x1x4x18xf32>
    %29 = vector.shape_cast %28 : vector<1x1x4x18xf32> to vector<4x18xf32>
    %c0_27 = arith.constant 0 : index
    %c0_28 = arith.constant 0 : index
    %c0_29 = arith.constant 0 : index
    %30 = vector.load %arg3[%c0_27, %c0_28, %c0_29] : memref<3x18x6xf32, #tpu.memory_space<vmem>>, vector<1x18x6xf32>
    %31 = vector.shape_cast %30 : vector<1x18x6xf32> to vector<18x6xf32>
    %cst_30 = arith.constant dense<0.000000e+00> : vector<4x6xf32>
    %32 = tpu.matmul %29, %31, %cst_30 {dimension_numbers = #tpu.dot_dimension_numbers<[1], [0], [0], [1], [0, 0, 1, 1], [], []>} : vector<4x18xf32>, vector<18x6xf32>, vector<4x6xf32> -> vector<4x6xf32>
    %33 = arith.addf %27, %32 : vector<4x6xf32>
    %c0_31 = arith.constant 0 : index
    %c0_32 = arith.constant 0 : index
    %c4 = arith.constant 4 : index
    %c0_33 = arith.constant 0 : index
    %34 = tpu.strided_load %arg2[%c0_31, %c0_32, %c4, %c0_33] {strides = array<i32: 1, 1, 6, 1>} : memref<1x1x24x18xf32, #tpu.memory_space<vmem>>, vector<1x1x4x18xf32>
    %35 = vector.shape_cast %34 : vector<1x1x4x18xf32> to vector<4x18xf32>
    %c1_34 = arith.constant 1 : index
    %c0_35 = arith.constant 0 : index
    %c0_36 = arith.constant 0 : index
    %36 = vector.load %arg3[%c1_34, %c0_35, %c0_36] : memref<3x18x6xf32, #tpu.memory_space<vmem>>, vector<1x18x6xf32>
    %37 = vector.shape_cast %36 : vector<1x18x6xf32> to vector<18x6xf32>
    %cst_37 = arith.constant dense<0.000000e+00> : vector<4x6xf32>
    %38 = tpu.matmul %35, %37, %cst_37 {dimension_numbers = #tpu.dot_dimension_numbers<[1], [0], [0], [1], [0, 0, 1, 1], [], []>} : vector<4x18xf32>, vector<18x6xf32>, vector<4x6xf32> -> vector<4x6xf32>
    %39 = arith.addf %33, %38 : vector<4x6xf32>
    %c0_38 = arith.constant 0 : index
    %c0_39 = arith.constant 0 : index
    %c5 = arith.constant 5 : index
    %c0_40 = arith.constant 0 : index
    %40 = tpu.strided_load %arg2[%c0_38, %c0_39, %c5, %c0_40] {strides = array<i32: 1, 1, 6, 1>} : memref<1x1x24x18xf32, #tpu.memory_space<vmem>>, vector<1x1x4x18xf32>
    %41 = vector.shape_cast %40 : vector<1x1x4x18xf32> to vector<4x18xf32>
    %c2_41 = arith.constant 2 : index
    %c0_42 = arith.constant 0 : index
    %c0_43 = arith.constant 0 : index
    %42 = vector.load %arg3[%c2_41, %c0_42, %c0_43] : memref<3x18x6xf32, #tpu.memory_space<vmem>>, vector<1x18x6xf32>
    %43 = vector.shape_cast %42 : vector<1x18x6xf32> to vector<18x6xf32>
    %cst_44 = arith.constant dense<0.000000e+00> : vector<4x6xf32>
    %44 = tpu.matmul %41, %43, %cst_44 {dimension_numbers = #tpu.dot_dimension_numbers<[1], [0], [0], [1], [0, 0, 1, 1], [], []>} : vector<4x18xf32>, vector<18x6xf32>, vector<4x6xf32> -> vector<4x6xf32>
    %45 = arith.addf %39, %44 : vector<4x6xf32>
    %46 = vector.broadcast %0 : f32 to vector<4x6xf32>
    %47 = arith.addf %45, %46 : vector<4x6xf32>
    %cst_45 = arith.constant 0.000000e+00 : f32
    %48 = vector.broadcast %cst_45 : f32 to vector<4x6xf32>
    %49 = arith.maximumf %47, %48 : vector<4x6xf32>
    %50 = vector.extract_strided_slice %49 {offsets = [0, 0], sizes = [4, 3], strides = [1, 1]} : vector<4x6xf32> to vector<4x3xf32>
    %51 = vector.extract_strided_slice %49 {offsets = [0, 3], sizes = [4, 3], strides = [1, 1]} : vector<4x6xf32> to vector<4x3xf32>
    %52 = arith.maximumf %50, %51 : vector<4x3xf32>
    %53 = arith.maximumf %26, %52 : vector<4x3xf32>
    %c0_46 = arith.constant 0 : index
    %c0_47 = arith.constant 0 : index
    %c0_48 = arith.constant 0 : index
    %c0_49 = arith.constant 0 : index
    %54 = vector.load %arg5[%c0_46, %c0_47, %c0_48, %c0_49] : memref<1x1x4x3xf32, #tpu.memory_space<vmem>>, vector<1x1x4x3xf32>
    %55 = vector.shape_cast %54 : vector<1x1x4x3xf32> to vector<4x3xf32>
    %56 = vector.shape_cast %53 : vector<4x3xf32> to vector<1x1x4x3xf32>
    tpu.vector_store %arg5[%c0_46, %c0_47, %c0_48, %c0_49], %56 {strides = array<i32>} : memref<1x1x4x3xf32, #tpu.memory_space<vmem>>, vector<1x1x4x3xf32>,
    return
  }
  func.func @transform_0(%arg0: i32, %arg1: i32) -> (i32, i32, i32, i32) {
    %c0_i32 = arith.constant 0 : i32
    %c0_i32_0 = arith.constant 0 : i32
    %c0_i32_1 = arith.constant 0 : i32
    return %arg0, %c0_i32, %arg1, %c0_i32_0 : i32, i32, i32, i32
  }
  func.func @transform_1(%arg0: i32, %arg1: i32) -> (i32, i32, i32) {
    %c0_i32 = arith.constant 0 : i32
    %c0_i32_0 = arith.constant 0 : i32
    %c0_i32_1 = arith.constant 0 : i32
    %c0_i32_2 = arith.constant 0 : i32
    return %c0_i32, %c0_i32_0, %c0_i32_1 : i32, i32, i32
  }
  func.func @transform_2(%arg0: i32, %arg1: i32) -> i32 {
    %c0_i32 = arith.constant 0 : i32
    %c0_i32_0 = arith.constant 0 : i32
    return %c0_i32 : i32
  }
  func.func @transform_3(%arg0: i32, %arg1: i32) -> (i32, i32, i32, i32) {
    %c0_i32 = arith.constant 0 : i32
    %c0_i32_0 = arith.constant 0 : i32
    %c0_i32_1 = arith.constant 0 : i32
    return %arg0, %arg1, %c0_i32, %c0_i32_0 : i32, i32, i32, i32
  }
}

module attributes {stable_mosaic.version = 11 : i64} {
  func.func @kernel(%arg0: i32, %arg1: i32, %arg2: memref<1x1x24x18xf32, #tpu.memory_space<vmem>>, %arg3: memref<3x18x6xf32, #tpu.memory_space<vmem>>, %arg4: memref<1xf32, #tpu.memory_space<smem>>, %arg5: memref<1x1x4x3xf32, #tpu.memory_space<vmem>>) attributes {dimension_semantics = [#tpu.dimension_semantics<parallel>, #tpu.dimension_semantics<parallel>], iteration_bounds = array<i64: 2, 1>, scalar_prefetch = 0 : i64, scratch_operands = 0 : i64, tpu.core_type = #tpu.core_type<tc>, window_params = [{transform_indices = @transform_0, window_bounds = array<i64: 1, 1, 24, 18>}, {pipeline_mode = #tpu.pipeline_mode<synchronous>, transform_indices = @transform_1, window_bounds = array<i64: 3, 18, 6>}, {transform_indices = @transform_2, window_bounds = array<i64: 1>}, {transform_indices = @transform_3, window_bounds = array<i64: 1, 1, 4, 3>}]} {
    %c0 = arith.constant 0 : index
    %0 = memref.load %arg4[%c0] : memref<1xf32, #tpu.memory_space<smem>>
    %c0_0 = arith.constant 0 : index
    %c0_1 = arith.constant 0 : index
    %c0_2 = arith.constant 0 : index
    %c0_3 = arith.constant 0 : index
    %1 = vector.load %arg2[%c0_0, %c0_1, %c0_2, %c0_3] : memref<1x1x24x18xf32, #tpu.memory_space<vmem>>, vector<1x1x24x18xf32>
    %2 = vector.shape_cast %1 : vector<1x1x24x18xf32> to vector<24x18xf32>
    %3 = tpu.iota {dimensions = array<i32: 0>} : vector<24x18xi32>
    %c24_i32 = arith.constant 24 : i32
    %4 = arith.muli %c24_i32, %arg1 : i32
    %c18_i32 = arith.constant 18 : i32
    %5 = arith.subi %c18_i32, %4 : i32
    %6 = vector.broadcast %5 : i32 to vector<24x18xi32>
    %7 = arith.cmpi slt, %3, %6 : vector<24x18xi32>
    %cst = arith.constant 0.000000e+00 : f32
    %8 = vector.broadcast %cst : f32 to vector<24x18xf32>
    %9 = arith.select %7, %2, %8 : vector<24x18xi1>, vector<24x18xf32>
    %10 = tpu.iota {dimensions = array<i32: 0>} : vector<4x24xi32>
    %11 = tpu.iota {dimensions = array<i32: 1>} : vector<4x24xi32>
    %cst_4 = arith.constant 0.000000e+00 : f32
    %12 = vector.broadcast %cst_4 : f32 to vector<4x6xf32>
    %c6_i32 = arith.constant 6 : i32
    %13 = vector.broadcast %c6_i32 : i32 to vector<4x24xi32>
    %14 = arith.muli %13, %10 : vector<4x24xi32>
    %c0_i32 = arith.constant 0 : i32
    %15 = vector.broadcast %c0_i32 : i32 to vector<4x24xi32>
    %16 = arith.addi %14, %15 : vector<4x24xi32>
    %17 = arith.cmpi eq, %11, %16 : vector<4x24xi32>
    %18 = arith.extui %17 : vector<4x24xi1> to vector<4x24xi32>
    %19 = arith.sitofp %18 : vector<4x24xi32> to vector<4x24xf32>
    %cst_5 = arith.constant dense<0.000000e+00> : vector<4x18xf32>
    %20 = tpu.matmul %19, %9, %cst_5 {dimension_numbers = #tpu.dot_dimension_numbers<[1], [0], [0], [1], [0, 0, 1, 1], [], []>} : vector<4x24xf32>, vector<24x18xf32>, vector<4x18xf32> -> vector<4x18xf32>
    %c0_6 = arith.constant 0 : index
    %c0_7 = arith.constant 0 : index
    %c0_8 = arith.constant 0 : index
    %21 = vector.load %arg3[%c0_6, %c0_7, %c0_8] : memref<3x18x6xf32, #tpu.memory_space<vmem>>, vector<1x18x6xf32>
    %22 = vector.shape_cast %21 : vector<1x18x6xf32> to vector<18x6xf32>
    %cst_9 = arith.constant dense<0.000000e+00> : vector<4x6xf32>
    %23 = tpu.matmul %20, %22, %cst_9 {dimension_numbers = #tpu.dot_dimension_numbers<[1], [0], [0], [1], [0, 0, 1, 1], [], []>} : vector<4x18xf32>, vector<18x6xf32>, vector<4x6xf32> -> vector<4x6xf32>
    %24 = arith.addf %12, %23 : vector<4x6xf32>
    %c6_i32_10 = arith.constant 6 : i32
    %25 = vector.broadcast %c6_i32_10 : i32 to vector<4x24xi32>
    %26 = arith.muli %25, %10 : vector<4x24xi32>
    %c1_i32 = arith.constant 1 : i32
    %27 = vector.broadcast %c1_i32 : i32 to vector<4x24xi32>
    %28 = arith.addi %26, %27 : vector<4x24xi32>
    %29 = arith.cmpi eq, %11, %28 : vector<4x24xi32>
    %30 = arith.extui %29 : vector<4x24xi1> to vector<4x24xi32>
    %31 = arith.sitofp %30 : vector<4x24xi32> to vector<4x24xf32>
    %cst_11 = arith.constant dense<0.000000e+00> : vector<4x18xf32>
    %32 = tpu.matmul %31, %9, %cst_11 {dimension_numbers = #tpu.dot_dimension_numbers<[1], [0], [0], [1], [0, 0, 1, 1], [], []>} : vector<4x24xf32>, vector<24x18xf32>, vector<4x18xf32> -> vector<4x18xf32>
    %c1 = arith.constant 1 : index
    %c0_12 = arith.constant 0 : index
    %c0_13 = arith.constant 0 : index
    %33 = vector.load %arg3[%c1, %c0_12, %c0_13] : memref<3x18x6xf32, #tpu.memory_space<vmem>>, vector<1x18x6xf32>
    %34 = vector.shape_cast %33 : vector<1x18x6xf32> to vector<18x6xf32>
    %cst_14 = arith.constant dense<0.000000e+00> : vector<4x6xf32>
    %35 = tpu.matmul %32, %34, %cst_14 {dimension_numbers = #tpu.dot_dimension_numbers<[1], [0], [0], [1], [0, 0, 1, 1], [], []>} : vector<4x18xf32>, vector<18x6xf32>, vector<4x6xf32> -> vector<4x6xf32>
    %36 = arith.addf %24, %35 : vector<4x6xf32>
    %c6_i32_15 = arith.constant 6 : i32
    %37 = vector.broadcast %c6_i32_15 : i32 to vector<4x24xi32>
    %38 = arith.muli %37, %10 : vector<4x24xi32>
    %c2_i32 = arith.constant 2 : i32
    %39 = vector.broadcast %c2_i32 : i32 to vector<4x24xi32>
    %40 = arith.addi %38, %39 : vector<4x24xi32>
    %41 = arith.cmpi eq, %11, %40 : vector<4x24xi32>
    %42 = arith.extui %41 : vector<4x24xi1> to vector<4x24xi32>
    %43 = arith.sitofp %42 : vector<4x24xi32> to vector<4x24xf32>
    %cst_16 = arith.constant dense<0.000000e+00> : vector<4x18xf32>
    %44 = tpu.matmul %43, %9, %cst_16 {dimension_numbers = #tpu.dot_dimension_numbers<[1], [0], [0], [1], [0, 0, 1, 1], [], []>} : vector<4x24xf32>, vector<24x18xf32>, vector<4x18xf32> -> vector<4x18xf32>
    %c2 = arith.constant 2 : index
    %c0_17 = arith.constant 0 : index
    %c0_18 = arith.constant 0 : index
    %45 = vector.load %arg3[%c2, %c0_17, %c0_18] : memref<3x18x6xf32, #tpu.memory_space<vmem>>, vector<1x18x6xf32>
    %46 = vector.shape_cast %45 : vector<1x18x6xf32> to vector<18x6xf32>
    %cst_19 = arith.constant dense<0.000000e+00> : vector<4x6xf32>
    %47 = tpu.matmul %44, %46, %cst_19 {dimension_numbers = #tpu.dot_dimension_numbers<[1], [0], [0], [1], [0, 0, 1, 1], [], []>} : vector<4x18xf32>, vector<18x6xf32>, vector<4x6xf32> -> vector<4x6xf32>
    %48 = arith.addf %36, %47 : vector<4x6xf32>
    %49 = vector.broadcast %0 : f32 to vector<4x6xf32>
    %50 = arith.addf %48, %49 : vector<4x6xf32>
    %cst_20 = arith.constant 0.000000e+00 : f32
    %51 = vector.broadcast %cst_20 : f32 to vector<4x6xf32>
    %52 = arith.maximumf %50, %51 : vector<4x6xf32>
    %53 = vector.extract_strided_slice %52 {offsets = [0, 0], sizes = [4, 3], strides = [1, 1]} : vector<4x6xf32> to vector<4x3xf32>
    %54 = vector.extract_strided_slice %52 {offsets = [0, 3], sizes = [4, 3], strides = [1, 1]} : vector<4x6xf32> to vector<4x3xf32>
    %55 = arith.maximumf %53, %54 : vector<4x3xf32>
    %cst_21 = arith.constant 0.000000e+00 : f32
    %56 = vector.broadcast %cst_21 : f32 to vector<4x6xf32>
    %c6_i32_22 = arith.constant 6 : i32
    %57 = vector.broadcast %c6_i32_22 : i32 to vector<4x24xi32>
    %58 = arith.muli %57, %10 : vector<4x24xi32>
    %c3_i32 = arith.constant 3 : i32
    %59 = vector.broadcast %c3_i32 : i32 to vector<4x24xi32>
    %60 = arith.addi %58, %59 : vector<4x24xi32>
    %61 = arith.cmpi eq, %11, %60 : vector<4x24xi32>
    %62 = arith.extui %61 : vector<4x24xi1> to vector<4x24xi32>
    %63 = arith.sitofp %62 : vector<4x24xi32> to vector<4x24xf32>
    %cst_23 = arith.constant dense<0.000000e+00> : vector<4x18xf32>
    %64 = tpu.matmul %63, %9, %cst_23 {dimension_numbers = #tpu.dot_dimension_numbers<[1], [0], [0], [1], [0, 0, 1, 1], [], []>} : vector<4x24xf32>, vector<24x18xf32>, vector<4x18xf32> -> vector<4x18xf32>
    %c0_24 = arith.constant 0 : index
    %c0_25 = arith.constant 0 : index
    %c0_26 = arith.constant 0 : index
    %65 = vector.load %arg3[%c0_24, %c0_25, %c0_26] : memref<3x18x6xf32, #tpu.memory_space<vmem>>, vector<1x18x6xf32>
    %66 = vector.shape_cast %65 : vector<1x18x6xf32> to vector<18x6xf32>
    %cst_27 = arith.constant dense<0.000000e+00> : vector<4x6xf32>
    %67 = tpu.matmul %64, %66, %cst_27 {dimension_numbers = #tpu.dot_dimension_numbers<[1], [0], [0], [1], [0, 0, 1, 1], [], []>} : vector<4x18xf32>, vector<18x6xf32>, vector<4x6xf32> -> vector<4x6xf32>
    %68 = arith.addf %56, %67 : vector<4x6xf32>
    %c6_i32_28 = arith.constant 6 : i32
    %69 = vector.broadcast %c6_i32_28 : i32 to vector<4x24xi32>
    %70 = arith.muli %69, %10 : vector<4x24xi32>
    %c4_i32 = arith.constant 4 : i32
    %71 = vector.broadcast %c4_i32 : i32 to vector<4x24xi32>
    %72 = arith.addi %70, %71 : vector<4x24xi32>
    %73 = arith.cmpi eq, %11, %72 : vector<4x24xi32>
    %74 = arith.extui %73 : vector<4x24xi1> to vector<4x24xi32>
    %75 = arith.sitofp %74 : vector<4x24xi32> to vector<4x24xf32>
    %cst_29 = arith.constant dense<0.000000e+00> : vector<4x18xf32>
    %76 = tpu.matmul %75, %9, %cst_29 {dimension_numbers = #tpu.dot_dimension_numbers<[1], [0], [0], [1], [0, 0, 1, 1], [], []>} : vector<4x24xf32>, vector<24x18xf32>, vector<4x18xf32> -> vector<4x18xf32>
    %c1_30 = arith.constant 1 : index
    %c0_31 = arith.constant 0 : index
    %c0_32 = arith.constant 0 : index
    %77 = vector.load %arg3[%c1_30, %c0_31, %c0_32] : memref<3x18x6xf32, #tpu.memory_space<vmem>>, vector<1x18x6xf32>
    %78 = vector.shape_cast %77 : vector<1x18x6xf32> to vector<18x6xf32>
    %cst_33 = arith.constant dense<0.000000e+00> : vector<4x6xf32>
    %79 = tpu.matmul %76, %78, %cst_33 {dimension_numbers = #tpu.dot_dimension_numbers<[1], [0], [0], [1], [0, 0, 1, 1], [], []>} : vector<4x18xf32>, vector<18x6xf32>, vector<4x6xf32> -> vector<4x6xf32>
    %80 = arith.addf %68, %79 : vector<4x6xf32>
    %c6_i32_34 = arith.constant 6 : i32
    %81 = vector.broadcast %c6_i32_34 : i32 to vector<4x24xi32>
    %82 = arith.muli %81, %10 : vector<4x24xi32>
    %c5_i32 = arith.constant 5 : i32
    %83 = vector.broadcast %c5_i32 : i32 to vector<4x24xi32>
    %84 = arith.addi %82, %83 : vector<4x24xi32>
    %85 = arith.cmpi eq, %11, %84 : vector<4x24xi32>
    %86 = arith.extui %85 : vector<4x24xi1> to vector<4x24xi32>
    %87 = arith.sitofp %86 : vector<4x24xi32> to vector<4x24xf32>
    %cst_35 = arith.constant dense<0.000000e+00> : vector<4x18xf32>
    %88 = tpu.matmul %87, %9, %cst_35 {dimension_numbers = #tpu.dot_dimension_numbers<[1], [0], [0], [1], [0, 0, 1, 1], [], []>} : vector<4x24xf32>, vector<24x18xf32>, vector<4x18xf32> -> vector<4x18xf32>
    %c2_36 = arith.constant 2 : index
    %c0_37 = arith.constant 0 : index
    %c0_38 = arith.constant 0 : index
    %89 = vector.load %arg3[%c2_36, %c0_37, %c0_38] : memref<3x18x6xf32, #tpu.memory_space<vmem>>, vector<1x18x6xf32>
    %90 = vector.shape_cast %89 : vector<1x18x6xf32> to vector<18x6xf32>
    %cst_39 = arith.constant dense<0.000000e+00> : vector<4x6xf32>
    %91 = tpu.matmul %88, %90, %cst_39 {dimension_numbers = #tpu.dot_dimension_numbers<[1], [0], [0], [1], [0, 0, 1, 1], [], []>} : vector<4x18xf32>, vector<18x6xf32>, vector<4x6xf32> -> vector<4x6xf32>
    %92 = arith.addf %80, %91 : vector<4x6xf32>
    %93 = vector.broadcast %0 : f32 to vector<4x6xf32>
    %94 = arith.addf %92, %93 : vector<4x6xf32>
    %cst_40 = arith.constant 0.000000e+00 : f32
    %95 = vector.broadcast %cst_40 : f32 to vector<4x6xf32>
    %96 = arith.maximumf %94, %95 : vector<4x6xf32>
    %97 = vector.extract_strided_slice %96 {offsets = [0, 0], sizes = [4, 3], strides = [1, 1]} : vector<4x6xf32> to vector<4x3xf32>
    %98 = vector.extract_strided_slice %96 {offsets = [0, 3], sizes = [4, 3], strides = [1, 1]} : vector<4x6xf32> to vector<4x3xf32>
    %99 = arith.maximumf %97, %98 : vector<4x3xf32>
    %100 = arith.maximumf %55, %99 : vector<4x3xf32>
    %c0_41 = arith.constant 0 : index
    %c0_42 = arith.constant 0 : index
    %c0_43 = arith.constant 0 : index
    %c0_44 = arith.constant 0 : index
    %101 = vector.load %arg5[%c0_41, %c0_42, %c0_43, %c0_44] : memref<1x1x4x3xf32, #tpu.memory_space<vmem>>, vector<1x1x4x3xf32>
    %102 = vector.shape_cast %101 : vector<1x1x4x3xf32> to vector<4x3xf32>
    %103 = vector.shape_cast %100 : vector<4x3xf32> to vector<1x1x4x3xf32>
    tpu.vector_store %arg5[%c0_41, %c0_42, %c0_43, %c0_44], %103 {strides = array<i32>} : memref<1x1x4x3xf32, #tpu.memory_space<vmem>>, vector<1x1x4x3xf32>,
    return
  }
  func.func @transform_0(%arg0: i32, %arg1: i32) -> (i32, i32, i32, i32) {
    %c0_i32 = arith.constant 0 : i32
    %c0_i32_0 = arith.constant 0 : i32
    %c0_i32_1 = arith.constant 0 : i32
    return %arg0, %c0_i32, %arg1, %c0_i32_0 : i32, i32, i32, i32
  }
  func.func @transform_1(%arg0: i32, %arg1: i32) -> (i32, i32, i32) {
    %c0_i32 = arith.constant 0 : i32
    %c0_i32_0 = arith.constant 0 : i32
    %c0_i32_1 = arith.constant 0 : i32
    %c0_i32_2 = arith.constant 0 : i32
    return %c0_i32, %c0_i32_0, %c0_i32_1 : i32, i32, i32
  }
  func.func @transform_2(%arg0: i32, %arg1: i32) -> i32 {
    %c0_i32 = arith.constant 0 : i32
    %c0_i32_0 = arith.constant 0 : i32
    return %c0_i32 : i32
  }
  func.func @transform_3(%arg0: i32, %arg1: i32) -> (i32, i32, i32, i32) {
    %c0_i32 = arith.constant 0 : i32
    %c0_i32_0 = arith.constant 0 : i32
    %c0_i32_1 = arith.constant 0 : i32
    return %arg0, %arg1, %c0_i32, %c0_i32_0 : i32, i32, i32, i32
  }
}

</mosaic_0001>

<llo_original>
// kernel: tpu_custom_call.1
$region0: #{tpu_custom_call.1}
  #allocation0 [shape = 'u32[]', space=smem, size = 0x4, offset = 0x4, fixed_abs, tag = 'smem constant byte address 0x4 - core index']
  #allocation1 [shape = 'u32[144,128]{1,0:T(1,128)}', space=vmem, size = 0x12000, scoped, tag = 'internal scratch']
  #allocation2 [shape = 'f32[1]{0:T(128)S(6)}', space=smem, size = 0x200, scoped, tag = 'scoped memory for tpu_custom_call.1']
  %s0 = inlined_call_operand.vmem [shape: f32[2,1,18,18], index: 0, kind: input, shape index: {}]
  %s1 = inlined_call_operand.vmem [shape: f32[3,18,6], index: 1, kind: input, shape index: {}]
  %s2 = inlined_call_operand.<no memory space> [shape: f32[1], index: 2, kind: input, shape index: {}]
  %s3 = inlined_call_operand.vmem [shape: f32[2,1,4,3], index: 3, kind: output, shape index: {}]
  %s4 = sld [smem:[#allocation0]]
  $region45: #{tpu_custom_call.1} parent=0
    _
  %s6 = ssub.s32 1, %s4
  %s7 = scalar_select 0, %s6, %s4
  %8 = sst [smem:[#allocation2]] %s2
  loop: start=0, step=1, limit=4
  $region2: #{tpu_custom_call.1} parent=0 // loop_pre_header
    _
  $region3: #{tpu_custom_call.1} parent=0 // loop_header
    %s10 = sphi 0, %s14
    %p11 = scmp.ge.s32.totalorder %s10, 4
    %s17 = sphi 0, %s29
    %s18 = sphi 0, %s25
    %s19 = sphi 0, %s17
    %s20 = sphi 0, %s18
    %s21 = sphi 0, %s19
    %s22 = sphi 0, %s20
    %s34 = sphi 0, %s36
    %s37 = sphi 0, %s34
    %s38 = sphi 0, %s37
    %s54 = sphi 0, %s38
    %s58 = sphi 0, %s58
    %s60 = sphi 0, %s58
    %s61 = sphi 0, %s60
    %s75 = sphi 0, %s61
    %s79 = sphi 0, %s79
    %s81 = sphi 0, %s79
    %s82 = sphi 0, %s81
    %s96 = sphi 0, %s82
    %s104 = sphi 0, %s106
    %s107 = sphi 0, %s104
    %s108 = sphi 0, %s107
    %s124 = sphi 0, %s108
  $region4: #{tpu_custom_call.1} parent=0 // loop_header_branch
    %13 = sbr.rel (%p11) target = $region8
  $region5: #{tpu_custom_call.1} parent=0 // loop_body
    %s15 = ssub.s32 %s10, 1
    %s16 = ssub.s32 %s10, 2
    %s23 = sadd.s32 1, %s18
    %p24 = scmp.ge.s32.totalorder %s23, 1
    %s25 = scalar_select %p24, 0, %s23
    %s26 = sadd.s32 1, %s17
    %s27 = scalar_select %p24, %s26, %s17
    %p28 = scmp.ge.s32.totalorder %s27, 2
    %s29 = scalar_select %p28, 0, %s27
    %s30 = ssub.s32 %s17, %s29
    %s31 = ssub.s32 %s18, %s25
    %s32 = sor.u32 %s30, %s31
    %p33 = scmp.eq.s32.totalorder %s32, 0
    %s35 = sadd.s32 %s34, 1
    %s36 = scalar_select %p33, %s34, %s35
    %p39 = pneg %p33
    %p40 = scmp.eq.s32.totalorder %s10, 1
    %p41 = por %p39, %p40
    %p42 = scmp.ne.s32.totalorder %s34, %s37
    %p43 = scmp.eq.s32.totalorder %s10, 0
    %p44 = por %p42, %p43
    %p45 = scmp.ne.s32.totalorder %s34, %s37
    %p46 = scmp.eq.s32.totalorder %s15, 1
    %p47 = por %p45, %p46
    %p48 = scmp.ne.s32.totalorder %s37, %s38
    %p49 = scmp.eq.s32.totalorder %s15, 0
    %p50 = por %p48, %p49
    %p51 = scmp.ne.s32.totalorder %s37, %s38
    %p52 = scmp.eq.s32.totalorder %s16, 1
    %p53 = por %p51, %p52
    %p55 = scmp.ne.s32.totalorder %s38, %s54
    %p56 = scmp.eq.s32.totalorder %s16, 0
    %p57 = por %p55, %p56
    %s59 = sadd.s32 %s58, 1
    %p62 = scmp.eq.s32.totalorder %s10, 1
    %p63 = scmp.ne.s32.totalorder %s58, %s60
    %p64 = scmp.eq.s32.totalorder %s10, 0
    %p65 = por %p63, %p64
    %p66 = scmp.ne.s32.totalorder %s58, %s60
    %p67 = scmp.eq.s32.totalorder %s15, 1
    %p68 = por %p66, %p67
    %p69 = scmp.ne.s32.totalorder %s60, %s61
    %p70 = scmp.eq.s32.totalorder %s15, 0
    %p71 = por %p69, %p70
    %p72 = scmp.ne.s32.totalorder %s60, %s61
    %p73 = scmp.eq.s32.totalorder %s16, 1
    %p74 = por %p72, %p73
    %p76 = scmp.ne.s32.totalorder %s61, %s75
    %p77 = scmp.eq.s32.totalorder %s16, 0
    %p78 = por %p76, %p77
    %s80 = sadd.s32 %s79, 1
    %p83 = scmp.eq.s32.totalorder %s10, 1
    %p84 = scmp.ne.s32.totalorder %s79, %s81
    %p85 = scmp.eq.s32.totalorder %s10, 0
    %p86 = por %p84, %p85
    %p87 = scmp.ne.s32.totalorder %s79, %s81
    %p88 = scmp.eq.s32.totalorder %s15, 1
    %p89 = por %p87, %p88
    %p90 = scmp.ne.s32.totalorder %s81, %s82
    %p91 = scmp.eq.s32.totalorder %s15, 0
    %p92 = por %p90, %p91
    %p93 = scmp.ne.s32.totalorder %s81, %s82
    %p94 = scmp.eq.s32.totalorder %s16, 1
    %p95 = por %p93, %p94
    %p97 = scmp.ne.s32.totalorder %s82, %s96
    %p98 = scmp.eq.s32.totalorder %s16, 0
    %p99 = por %p97, %p98
    %s100 = ssub.s32 %s17, %s29
    %s101 = ssub.s32 %s18, %s25
    %s102 = sor.u32 %s100, %s101
    %p103 = scmp.eq.s32.totalorder %s102, 0
    %s105 = sadd.s32 %s104, 1
    %s106 = scalar_select %p103, %s104, %s105
    %p109 = pneg %p103
    %p110 = scmp.eq.s32.totalorder %s10, 1
    %p111 = por %p109, %p110
    %p112 = scmp.ne.s32.totalorder %s104, %s107
    %p113 = scmp.eq.s32.totalorder %s10, 0
    %p114 = por %p112, %p113
    %p115 = scmp.ne.s32.totalorder %s104, %s107
    %p116 = scmp.eq.s32.totalorder %s15, 1
    %p117 = por %p115, %p116
    %p118 = scmp.ne.s32.totalorder %s107, %s108
    %p119 = scmp.eq.s32.totalorder %s15, 0
    %p120 = por %p118, %p119
    %p121 = scmp.ne.s32.totalorder %s107, %s108
    %p122 = scmp.eq.s32.totalorder %s16, 1
    %p123 = por %p121, %p122
    %p125 = scmp.ne.s32.totalorder %s108, %s124
    %p126 = scmp.eq.s32.totalorder %s16, 0
    %p127 = por %p125, %p126
    %p128 = scmp.le.s32.totalorder 1, %s10
    %p129 = scmp.lt.s32.totalorder %s10, 3
    %p130 = pnand %p128, %p129
    %p131 = pneg %p130
    // Predicated region
    $region9: #{tpu_custom_call.1} parent=5 // pred_check
      _
    $region10: #{tpu_custom_call.1} parent=5 // pred_check_branch
      %133 = sbr.rel (%p130) target = $region12
    $region11: #{tpu_custom_call.1} parent=5 // pred_region
      %s134 = ssub.s32 %s10, 1
      // Predicated region
      $region13: #{tpu_custom_call.1} parent=11 // pred_check
        %p135 = pneg %p71
      $region14: #{tpu_custom_call.1} parent=11 // pred_check_branch
        %137 = sbr.rel (%p135) target = $region16
      $region15: #{tpu_custom_call.1} parent=11 // pred_region
        _
      $region16: #{tpu_custom_call.1} parent=11 // pred_fallthru
        _
      // Predicated region
      $region17: #{tpu_custom_call.1} parent=11 // pred_check
        %p138 = pneg %p92
      $region18: #{tpu_custom_call.1} parent=11 // pred_check_branch
        %140 = sbr.rel (%p138) target = $region20
      $region19: #{tpu_custom_call.1} parent=11 // pred_region
        _
      $region20: #{tpu_custom_call.1} parent=11 // pred_fallthru
        _
    $region12: #{tpu_custom_call.1} parent=5 // pred_fallthru
      _
    %p141 = scmp.lt.s32.totalorder %s10, 2
    // Predicated region
    $region21: #{tpu_custom_call.1} parent=5 // pred_check
      %p142 = pneg %p141
    $region22: #{tpu_custom_call.1} parent=5 // pred_check_branch
      %144 = sbr.rel (%p142) target = $region24
    $region23: #{tpu_custom_call.1} parent=5 // pred_region
      // Predicated region
      $region25: #{tpu_custom_call.1} parent=23 // pred_check
        %p145 = pneg %p44
      $region26: #{tpu_custom_call.1} parent=23 // pred_check_branch
        %147 = sbr.rel (%p145) target = $region28
      $region27: #{tpu_custom_call.1} parent=23 // pred_region
        %s148 = smul.u32 3, %s18
        %p149 = scmp.lt.s32.totalorder %s17, 1
        %s150 = scalar_select %p149, %s17, 1
        %p151 = scmp.lt.s32.totalorder %s148, 2
        %s152 = scalar_select %p151, %s148, 2
        %s153 = smul.addr %s150, 3
        %s154 = sadd.s32 %s152, %s153
        %s155 = smul.addr %s154, 8
        %s156 = scalar_lea.vmem %s0, %s155
        %s157 = smul.u32 3, %s18
      $region28: #{tpu_custom_call.1} parent=23 // pred_fallthru
        _
    $region24: #{tpu_custom_call.1} parent=5 // pred_fallthru
      _
    %p158 = scmp.le.s32.totalorder 1, %s10
    %p159 = scmp.lt.s32.totalorder %s10, 3
    %p160 = pnand %p158, %p159
    %p161 = pneg %p160
    // Predicated region
    $region29: #{tpu_custom_call.1} parent=5 // pred_check
      _
    $region30: #{tpu_custom_call.1} parent=5 // pred_check_branch
      %163 = sbr.rel (%p160) target = $region32
    $region31: #{tpu_custom_call.1} parent=5 // pred_region
      %s164 = ssub.s32 %s10, 1
      %s165 = smul.u32 3, %s20
      %p166 = scmp.lt.s32.totalorder %s19, 1
      %s167 = scalar_select %p166, %s19, 1
      %p168 = scmp.lt.s32.totalorder %s165, 2
      %s169 = scalar_select %p168, %s165, 2
      %s170 = smul.addr %s167, 3
      %s171 = sadd.s32 %s169, %s170
      %s172 = smul.addr %s171, 8
      %s173 = scalar_lea.vmem %s0, %s172
      %p174 = pneg %p50
      %p175 = pneg %p47
      %p176 = pneg %p71
      %p177 = pneg %p68
      %p178 = pneg %p92
      %p179 = pneg %p89
      %p180 = pneg %p120
      %p181 = pneg %p117
      %p182 = scmp.lt.s32.totalorder %s19, 1
      %s183 = scalar_select %p182, %s19, 1
      %p184 = scmp.lt.s32.totalorder %s20, 0
      %s185 = scalar_select %p184, %s20, 0
      %s186 = sadd.s32 %s185, %s183
      %s187 = smul.addr %s186, 4
      %s188 = scalar_lea.vmem %s3, %s187
      %s189 = smul.u32 3, %s20
      %p190 = scmp.lt.s32.totalorder %s19, 1
      %s191 = scalar_select %p190, %s19, 1
      %p192 = scmp.lt.s32.totalorder %s189, 2
      %s193 = scalar_select %p192, %s189, 2
      %s194 = smul.addr %s191, 3
      %s195 = sadd.s32 %s193, %s194
      %s196 = smul.addr %s195, 8
      %s197 = scalar_lea.vmem %s0, %s196
      %s198 = smul.u32 3, %s20
      %p199 = scmp.lt.s32.totalorder %s19, 1
      %s200 = scalar_select %p199, %s19, 1
      %p201 = scmp.lt.s32.totalorder %s20, 0
      %s202 = scalar_select %p201, %s20, 0
      %s203 = sadd.s32 %s202, %s200
      %s204 = smul.addr %s203, 4
      %s205 = scalar_lea.vmem %s3, %s204
      %s206 = sld [smem:[#allocation2]]
      %v207 = vld [vmem:[%s197] ss:$6 sm:$0xf]
      %v208 = vld [vmem:[%s1] sm:$0xff]
      %v209 = vld [vmem:[%s1 + $0x8] sm:$0xff]
      %v210 = vld [vmem:[%s1 + $0x10] sm:$0x3]
      %s211 = scalar_lea.vmem %s197, 1
      %v212 = vld [vmem:[%s211] ss:$6 sm:$0xf]
      %s213 = scalar_lea.vmem %s1, 24
      %v214 = vld [vmem:[%s213] sm:$0xff]
      %v215 = vld [vmem:[%s213 + $0x8] sm:$0xff]
      %v216 = vld [vmem:[%s213 + $0x10] sm:$0x3]
      %vm217 = vcmask 146432
      %v219 = vsel %vm217, %v212, 0
      %vm221 = vcmask 1041408
      %v223 = vsel %vm221, %v216, 0
      %225 = vmatprep.subr.mxu0 0.0
      %226 = vmatpush1.msra.mxu0 %v214
      %227 = vmatprep.subr.mxu0 0.0
      %228 = vmatpush1.msra.mxu0 %v215
      %229 = vmatprep.subr.mxu0 0.0
      %230 = vmatpush1.msra.mxu0 %v223
      %231 = vmatprep.subr.mxu0 0.0
      %232 = vmatpush1.msra.mxu0 0.0
      %233 = vmatprep.subr.mxu0 0.0
      %234 = vmatpush1.msra.mxu0 0.0
      %235 = vmatprep.subr.mxu0 0.0
      %236 = vmatpush1.msra.mxu0 0.0
      %237 = vmatprep.subr.mxu0 0.0
      %238 = vmatpush1.msra.mxu0 0.0
      %239 = vmatprep.subr.mxu0 0.0
      %240 = vmatpush1.msra.mxu0 0.0
      %241 = vmatprep.subr.mxu0 0.0
      %242 = vmatpush1.msra.mxu0 0.0
      %243 = vmatprep.subr.mxu0 0.0
      %244 = vmatpush1.msra.mxu0 0.0
      %245 = vmatprep.subr.mxu0 0.0
      %246 = vmatpush1.msra.mxu0 0.0
      %247 = vmatprep.subr.mxu0 0.0
      %248 = vmatpush1.msra.mxu0 0.0
      %249 = vmatprep.subr.mxu0 0.0
      %250 = vmatpush1.msra.mxu0 0.0
      %251 = vmatprep.subr.mxu0 0.0
      %252 = vmatpush1.msra.mxu0 0.0
      %253 = vmatprep.subr.mxu0 0.0
      %254 = vmatpush1.msra.mxu0 0.0
      %255 = vmatprep.subr.mxu0 0.0
      %256 = vmatpush1.msra.mxu0 0.0
      %257 = vmatprep.subr.mxu0 0.0
      %258 = vmatpush1.msra.mxu0 0.0
      %259 = vmatprep.subr.mxu0 0.0
      %260 = vmatpush1.msra.mxu0 0.0
      %261 = vmatprep.subr.mxu0 0.0
      %262 = vmatpush1.msra.mxu0 0.0
      %263 = vmatprep.subr.mxu0 0.0
      %264 = vmatpush1.msra.mxu0 0.0
      %265 = vmatprep.subr.mxu0 0.0
      %266 = vmatpush1.msra.mxu0 0.0
      %267 = vmatprep.subr.mxu0 0.0
      %268 = vmatpush1.msra.mxu0 0.0
      %269 = vmatprep.subr.mxu0 0.0
      %270 = vmatpush1.msra.mxu0 0.0
      %271 = vmatprep.subr.mxu0 0.0
      %272 = vmatpush1.msra.mxu0 0.0
      %273 = vmatprep.subr.mxu0 0.0
      %274 = vmatpush1.msra.mxu0 0.0
      %275 = vmatprep.subr.mxu0 0.0
      %276 = vmatpush1.msra.mxu0 0.0
      %277 = vmatprep.subr.mxu0 0.0
      %278 = vmatpush1.msra.mxu0 0.0
      %279 = vmatprep.subr.mxu0 0.0
      %280 = vmatpush1.msra.mxu0 0.0
      %281 = vmatprep.subr.mxu0 0.0
      %282 = vmatpush1.msra.mxu0 0.0
      %283 = vmatprep.subr.mxu0 0.0
      %284 = vmatpush1.msra.mxu0 0.0
      %285 = vmatprep.subr.mxu0 0.0
      %286 = vmatpush1.msra.mxu0 0.0
      %287 = vmatprep.subr.mxu0 0.0
      %288 = vmatpush1.msra.mxu0 0.0
      %289 = vmatprep.mubr.f32.mxu0 0.0
      %290 = vmatmul.mubr.f32.gmra.mrb[0].mxu0 %v219
      %v291 = vpop.f32.mrb[0].mxu0
      %v292 = vadd.f32 0.0, %v291
      %v293 = vpop.f32.mrb[0].mxu0
      %294 = vdwg.mxu0
      %v296 = vsel %vm217, %v207, 0
      %v299 = vsel %vm221, %v210, 0
      %301 = vmatprep.subr.mxu0 0.0
      %302 = vmatpush1.msra.mxu0 %v208
      %303 = vmatprep.subr.mxu0 0.0
      %304 = vmatpush1.msra.mxu0 %v209
      %305 = vmatprep.subr.mxu0 0.0
      %306 = vmatpush1.msra.mxu0 %v299
      %307 = vmatprep.subr.mxu0 0.0
      %308 = vmatpush1.msra.mxu0 0.0
      %309 = vmatprep.subr.mxu0 0.0
      %310 = vmatpush1.msra.mxu0 0.0
      %311 = vmatprep.subr.mxu0 0.0
      %312 = vmatpush1.msra.mxu0 0.0
      %313 = vmatprep.subr.mxu0 0.0
      %314 = vmatpush1.msra.mxu0 0.0
      %315 = vmatprep.subr.mxu0 0.0
      %316 = vmatpush1.msra.mxu0 0.0
      %317 = vmatprep.subr.mxu0 0.0
      %318 = vmatpush1.msra.mxu0 0.0
      %319 = vmatprep.subr.mxu0 0.0
      %320 = vmatpush1.msra.mxu0 0.0
      %321 = vmatprep.subr.mxu0 0.0
      %322 = vmatpush1.msra.mxu0 0.0
      %323 = vmatprep.subr.mxu0 0.0
      %324 = vmatpush1.msra.mxu0 0.0
      %325 = vmatprep.subr.mxu0 0.0
      %326 = vmatpush1.msra.mxu0 0.0
      %327 = vmatprep.subr.mxu0 0.0
      %328 = vmatpush1.msra.mxu0 0.0
      %329 = vmatprep.subr.mxu0 0.0
      %330 = vmatpush1.msra.mxu0 0.0
      %331 = vmatprep.subr.mxu0 0.0
      %332 = vmatpush1.msra.mxu0 0.0
      %333 = vmatprep.subr.mxu0 0.0
      %334 = vmatpush1.msra.mxu0 0.0
      %335 = vmatprep.subr.mxu0 0.0
      %336 = vmatpush1.msra.mxu0 0.0
      %337 = vmatprep.subr.mxu0 0.0
      %338 = vmatpush1.msra.mxu0 0.0
      %339 = vmatprep.subr.mxu0 0.0
      %340 = vmatpush1.msra.mxu0 0.0
      %341 = vmatprep.subr.mxu0 0.0
      %342 = vmatpush1.msra.mxu0 0.0
      %343 = vmatprep.subr.mxu0 0.0
      %344 = vmatpush1.msra.mxu0 0.0
      %345 = vmatprep.subr.mxu0 0.0
      %346 = vmatpush1.msra.mxu0 0.0
      %347 = vmatprep.subr.mxu0 0.0
      %348 = vmatpush1.msra.mxu0 0.0
      %349 = vmatprep.subr.mxu0 0.0
      %350 = vmatpush1.msra.mxu0 0.0
      %351 = vmatprep.subr.mxu0 0.0
      %352 = vmatpush1.msra.mxu0 0.0
      %353 = vmatprep.subr.mxu0 0.0
      %354 = vmatpush1.msra.mxu0 0.0
      %355 = vmatprep.subr.mxu0 0.0
      %356 = vmatpush1.msra.mxu0 0.0
      %357 = vmatprep.subr.mxu0 0.0
      %358 = vmatpush1.msra.mxu0 0.0
      %359 = vmatprep.subr.mxu0 0.0
      %360 = vmatpush1.msra.mxu0 0.0
      %361 = vmatprep.subr.mxu0 0.0
      %362 = vmatpush1.msra.mxu0 0.0
      %363 = vmatprep.subr.mxu0 0.0
      %364 = vmatpush1.msra.mxu0 0.0
      %365 = vmatprep.mubr.f32.mxu0 0.0
      %366 = vmatmul.mubr.f32.gmra.mrb[0].mxu0 %v296
      %v367 = vpop.f32.mrb[0].mxu0
      %v368 = vadd.f32 %v292, %v367
      %v369 = vpop.f32.mrb[0].mxu0
      %370 = vdwg.mxu0
      %s371 = scalar_lea.vmem %s197, 2
      %v372 = vld [vmem:[%s371] ss:$6 sm:$0xf]
      %s373 = scalar_lea.vmem %s1, 48
      %v374 = vld [vmem:[%s373] sm:$0xff]
      %v375 = vld [vmem:[%s373 + $0x8] sm:$0xff]
      %v376 = vld [vmem:[%s373 + $0x10] sm:$0x3]
      %v378 = vsel %vm217, %v372, 0
      %v381 = vsel %vm221, %v376, 0
      %383 = vmatprep.subr.mxu0 0.0
      %384 = vmatpush1.msra.mxu0 %v374
      %385 = vmatprep.subr.mxu0 0.0
      %386 = vmatpush1.msra.mxu0 %v375
      %387 = vmatprep.subr.mxu0 0.0
      %388 = vmatpush1.msra.mxu0 %v381
      %389 = vmatprep.subr.mxu0 0.0
      %390 = vmatpush1.msra.mxu0 0.0
      %391 = vmatprep.subr.mxu0 0.0
      %392 = vmatpush1.msra.mxu0 0.0
      %393 = vmatprep.subr.mxu0 0.0
      %394 = vmatpush1.msra.mxu0 0.0
      %395 = vmatprep.subr.mxu0 0.0
      %396 = vmatpush1.msra.mxu0 0.0
      %397 = vmatprep.subr.mxu0 0.0
      %398 = vmatpush1.msra.mxu0 0.0
      %399 = vmatprep.subr.mxu0 0.0
      %400 = vmatpush1.msra.mxu0 0.0
      %401 = vmatprep.subr.mxu0 0.0
      %402 = vmatpush1.msra.mxu0 0.0
      %403 = vmatprep.subr.mxu0 0.0
      %404 = vmatpush1.msra.mxu0 0.0
      %405 = vmatprep.subr.mxu0 0.0
      %406 = vmatpush1.msra.mxu0 0.0
      %407 = vmatprep.subr.mxu0 0.0
      %408 = vmatpush1.msra.mxu0 0.0
      %409 = vmatprep.subr.mxu0 0.0
      %410 = vmatpush1.msra.mxu0 0.0
      %411 = vmatprep.subr.mxu0 0.0
      %412 = vmatpush1.msra.mxu0 0.0
      %413 = vmatprep.subr.mxu0 0.0
      %414 = vmatpush1.msra.mxu0 0.0
      %415 = vmatprep.subr.mxu0 0.0
      %416 = vmatpush1.msra.mxu0 0.0
      %417 = vmatprep.subr.mxu0 0.0
      %418 = vmatpush1.msra.mxu0 0.0
      %419 = vmatprep.subr.mxu0 0.0
      %420 = vmatpush1.msra.mxu0 0.0
      %421 = vmatprep.subr.mxu0 0.0
      %422 = vmatpush1.msra.mxu0 0.0
      %423 = vmatprep.subr.mxu0 0.0
      %424 = vmatpush1.msra.mxu0 0.0
      %425 = vmatprep.subr.mxu0 0.0
      %426 = vmatpush1.msra.mxu0 0.0
      %427 = vmatprep.subr.mxu0 0.0
      %428 = vmatpush1.msra.mxu0 0.0
      %429 = vmatprep.subr.mxu0 0.0
      %430 = vmatpush1.msra.mxu0 0.0
      %431 = vmatprep.subr.mxu0 0.0
      %432 = vmatpush1.msra.mxu0 0.0
      %433 = vmatprep.subr.mxu0 0.0
      %434 = vmatpush1.msra.mxu0 0.0
      %435 = vmatprep.subr.mxu0 0.0
      %436 = vmatpush1.msra.mxu0 0.0
      %437 = vmatprep.subr.mxu0 0.0
      %438 = vmatpush1.msra.mxu0 0.0
      %439 = vmatprep.subr.mxu0 0.0
      %440 = vmatpush1.msra.mxu0 0.0
      %441 = vmatprep.subr.mxu0 0.0
      %442 = vmatpush1.msra.mxu0 0.0
      %443 = vmatprep.subr.mxu0 0.0
      %444 = vmatpush1.msra.mxu0 0.0
      %445 = vmatprep.subr.mxu0 0.0
      %446 = vmatpush1.msra.mxu0 0.0
      %447 = vmatprep.mubr.f32.mxu0 0.0
      %448 = vmatmul.mubr.f32.gmra.mrb[0].mxu0 %v378
      %v449 = vpop.f32.mrb[0].mxu0
      %v450 = vadd.f32 0.0, %v449
      %v451 = vpop.f32.mrb[0].mxu0
      %452 = vdwg.mxu0
      %v453 = vadd.f32 %v368, %v450
      %v454 = vstv %s206
      %v455 = vadd.f32 %v453, %v454
      %v456 = vmax.f32 %v455, 0.0
      %458 = vrot.lane.b32.xlu0 %v456, 125
      %v459 = vpop.permute.xlu0 %458
      %v461 = vmax.f32 %v456, %v459
      %s462 = scalar_lea.vmem %s197, 3
      %v463 = vld [vmem:[%s462] ss:$6 sm:$0xf]
      %s464 = scalar_lea.vmem %s197, 4
      %v465 = vld [vmem:[%s464] ss:$6 sm:$0xf]
      %v467 = vsel %vm217, %v465, 0
      %469 = vmatprep.subr.mxu0 0.0
      %470 = vmatpush1.msra.mxu0 %v214
      %471 = vmatprep.subr.mxu0 0.0
      %472 = vmatpush1.msra.mxu0 %v215
      %473 = vmatprep.subr.mxu0 0.0
      %474 = vmatpush1.msra.mxu0 %v223
      %475 = vmatprep.subr.mxu0 0.0
      %476 = vmatpush1.msra.mxu0 0.0
      %477 = vmatprep.subr.mxu0 0.0
      %478 = vmatpush1.msra.mxu0 0.0
      %479 = vmatprep.subr.mxu0 0.0
      %480 = vmatpush1.msra.mxu0 0.0
      %481 = vmatprep.subr.mxu0 0.0
      %482 = vmatpush1.msra.mxu0 0.0
      %483 = vmatprep.subr.mxu0 0.0
      %484 = vmatpush1.msra.mxu0 0.0
      %485 = vmatprep.subr.mxu0 0.0
      %486 = vmatpush1.msra.mxu0 0.0
      %487 = vmatprep.subr.mxu0 0.0
      %488 = vmatpush1.msra.mxu0 0.0
      %489 = vmatprep.subr.mxu0 0.0
      %490 = vmatpush1.msra.mxu0 0.0
      %491 = vmatprep.subr.mxu0 0.0
      %492 = vmatpush1.msra.mxu0 0.0
      %493 = vmatprep.subr.mxu0 0.0
      %494 = vmatpush1.msra.mxu0 0.0
      %495 = vmatprep.subr.mxu0 0.0
      %496 = vmatpush1.msra.mxu0 0.0
      %497 = vmatprep.subr.mxu0 0.0
      %498 = vmatpush1.msra.mxu0 0.0
      %499 = vmatprep.subr.mxu0 0.0
      %500 = vmatpush1.msra.mxu0 0.0
      %501 = vmatprep.subr.mxu0 0.0
      %502 = vmatpush1.msra.mxu0 0.0
      %503 = vmatprep.subr.mxu0 0.0
      %504 = vmatpush1.msra.mxu0 0.0
      %505 = vmatprep.subr.mxu0 0.0
      %506 = vmatpush1.msra.mxu0 0.0
      %507 = vmatprep.subr.mxu0 0.0
      %508 = vmatpush1.msra.mxu0 0.0
      %509 = vmatprep.subr.mxu0 0.0
      %510 = vmatpush1.msra.mxu0 0.0
      %511 = vmatprep.subr.mxu0 0.0
      %512 = vmatpush1.msra.mxu0 0.0
      %513 = vmatprep.subr.mxu0 0.0
      %514 = vmatpush1.msra.mxu0 0.0
      %515 = vmatprep.subr.mxu0 0.0
      %516 = vmatpush1.msra.mxu0 0.0
      %517 = vmatprep.subr.mxu0 0.0
      %518 = vmatpush1.msra.mxu0 0.0
      %519 = vmatprep.subr.mxu0 0.0
      %520 = vmatpush1.msra.mxu0 0.0
      %521 = vmatprep.subr.mxu0 0.0
      %522 = vmatpush1.msra.mxu0 0.0
      %523 = vmatprep.subr.mxu0 0.0
      %524 = vmatpush1.msra.mxu0 0.0
      %525 = vmatprep.subr.mxu0 0.0
      %526 = vmatpush1.msra.mxu0 0.0
      %527 = vmatprep.subr.mxu0 0.0
      %528 = vmatpush1.msra.mxu0 0.0
      %529 = vmatprep.subr.mxu0 0.0
      %530 = vmatpush1.msra.mxu0 0.0
      %531 = vmatprep.subr.mxu0 0.0
      %532 = vmatpush1.msra.mxu0 0.0
      %533 = vmatprep.mubr.f32.mxu0 0.0
      %534 = vmatmul.mubr.f32.gmra.mrb[0].mxu0 %v467
      %v535 = vpop.f32.mrb[0].mxu0
      %v536 = vadd.f32 0.0, %v535
      %v537 = vpop.f32.mrb[0].mxu0
      %538 = vdwg.mxu0
      %v540 = vsel %vm217, %v463, 0
      %542 = vmatprep.subr.mxu0 0.0
      %543 = vmatpush1.msra.mxu0 %v208
      %544 = vmatprep.subr.mxu0 0.0
      %545 = vmatpush1.msra.mxu0 %v209
      %546 = vmatprep.subr.mxu0 0.0
      %547 = vmatpush1.msra.mxu0 %v299
      %548 = vmatprep.subr.mxu0 0.0
      %549 = vmatpush1.msra.mxu0 0.0
      %550 = vmatprep.subr.mxu0 0.0
      %551 = vmatpush1.msra.mxu0 0.0
      %552 = vmatprep.subr.mxu0 0.0
      %553 = vmatpush1.msra.mxu0 0.0
      %554 = vmatprep.subr.mxu0 0.0
      %555 = vmatpush1.msra.mxu0 0.0
      %556 = vmatprep.subr.mxu0 0.0
      %557 = vmatpush1.msra.mxu0 0.0
      %558 = vmatprep.subr.mxu0 0.0
      %559 = vmatpush1.msra.mxu0 0.0
      %560 = vmatprep.subr.mxu0 0.0
      %561 = vmatpush1.msra.mxu0 0.0
      %562 = vmatprep.subr.mxu0 0.0
      %563 = vmatpush1.msra.mxu0 0.0
      %564 = vmatprep.subr.mxu0 0.0
      %565 = vmatpush1.msra.mxu0 0.0
      %566 = vmatprep.subr.mxu0 0.0
      %567 = vmatpush1.msra.mxu0 0.0
      %568 = vmatprep.subr.mxu0 0.0
      %569 = vmatpush1.msra.mxu0 0.0
      %570 = vmatprep.subr.mxu0 0.0
      %571 = vmatpush1.msra.mxu0 0.0
      %572 = vmatprep.subr.mxu0 0.0
      %573 = vmatpush1.msra.mxu0 0.0
      %574 = vmatprep.subr.mxu0 0.0
      %575 = vmatpush1.msra.mxu0 0.0
      %576 = vmatprep.subr.mxu0 0.0
      %577 = vmatpush1.msra.mxu0 0.0
      %578 = vmatprep.subr.mxu0 0.0
      %579 = vmatpush1.msra.mxu0 0.0
      %580 = vmatprep.subr.mxu0 0.0
      %581 = vmatpush1.msra.mxu0 0.0
      %582 = vmatprep.subr.mxu0 0.0
      %583 = vmatpush1.msra.mxu0 0.0
      %584 = vmatprep.subr.mxu0 0.0
      %585 = vmatpush1.msra.mxu0 0.0
      %586 = vmatprep.subr.mxu0 0.0
      %587 = vmatpush1.msra.mxu0 0.0
      %588 = vmatprep.subr.mxu0 0.0
      %589 = vmatpush1.msra.mxu0 0.0
      %590 = vmatprep.subr.mxu0 0.0
      %591 = vmatpush1.msra.mxu0 0.0
      %592 = vmatprep.subr.mxu0 0.0
      %593 = vmatpush1.msra.mxu0 0.0
      %594 = vmatprep.subr.mxu0 0.0
      %595 = vmatpush1.msra.mxu0 0.0
      %596 = vmatprep.subr.mxu0 0.0
      %597 = vmatpush1.msra.mxu0 0.0
      %598 = vmatprep.subr.mxu0 0.0
      %599 = vmatpush1.msra.mxu0 0.0
      %600 = vmatprep.subr.mxu0 0.0
      %601 = vmatpush1.msra.mxu0 0.0
      %602 = vmatprep.subr.mxu0 0.0
      %603 = vmatpush1.msra.mxu0 0.0
      %604 = vmatprep.subr.mxu0 0.0
      %605 = vmatpush1.msra.mxu0 0.0
      %606 = vmatprep.mubr.f32.mxu0 0.0
      %607 = vmatmul.mubr.f32.gmra.mrb[0].mxu0 %v540
      %v608 = vpop.f32.mrb[0].mxu0
      %v609 = vadd.f32 %v536, %v608
      %v610 = vpop.f32.mrb[0].mxu0
      %611 = vdwg.mxu0
      %s612 = scalar_lea.vmem %s197, 5
      %v613 = vld [vmem:[%s612] ss:$6 sm:$0xf]
      %v615 = vsel %vm217, %v613, 0
      %617 = vmatprep.subr.mxu0 0.0
      %618 = vmatpush1.msra.mxu0 %v374
      %619 = vmatprep.subr.mxu0 0.0
      %620 = vmatpush1.msra.mxu0 %v375
      %621 = vmatprep.subr.mxu0 0.0
      %622 = vmatpush1.msra.mxu0 %v381
      %623 = vmatprep.subr.mxu0 0.0
      %624 = vmatpush1.msra.mxu0 0.0
      %625 = vmatprep.subr.mxu0 0.0
      %626 = vmatpush1.msra.mxu0 0.0
      %627 = vmatprep.subr.mxu0 0.0
      %628 = vmatpush1.msra.mxu0 0.0
      %629 = vmatprep.subr.mxu0 0.0
      %630 = vmatpush1.msra.mxu0 0.0
      %631 = vmatprep.subr.mxu0 0.0
      %632 = vmatpush1.msra.mxu0 0.0
      %633 = vmatprep.subr.mxu0 0.0
      %634 = vmatpush1.msra.mxu0 0.0
      %635 = vmatprep.subr.mxu0 0.0
      %636 = vmatpush1.msra.mxu0 0.0
      %637 = vmatprep.subr.mxu0 0.0
      %638 = vmatpush1.msra.mxu0 0.0
      %639 = vmatprep.subr.mxu0 0.0
      %640 = vmatpush1.msra.mxu0 0.0
      %641 = vmatprep.subr.mxu0 0.0
      %642 = vmatpush1.msra.mxu0 0.0
      %643 = vmatprep.subr.mxu0 0.0
      %644 = vmatpush1.msra.mxu0 0.0
      %645 = vmatprep.subr.mxu0 0.0
      %646 = vmatpush1.msra.mxu0 0.0
      %647 = vmatprep.subr.mxu0 0.0
      %648 = vmatpush1.msra.mxu0 0.0
      %649 = vmatprep.subr.mxu0 0.0
      %650 = vmatpush1.msra.mxu0 0.0
      %651 = vmatprep.subr.mxu0 0.0
      %652 = vmatpush1.msra.mxu0 0.0
      %653 = vmatprep.subr.mxu0 0.0
      %654 = vmatpush1.msra.mxu0 0.0
      %655 = vmatprep.subr.mxu0 0.0
      %656 = vmatpush1.msra.mxu0 0.0
      %657 = vmatprep.subr.mxu0 0.0
      %658 = vmatpush1.msra.mxu0 0.0
      %659 = vmatprep.subr.mxu0 0.0
      %660 = vmatpush1.msra.mxu0 0.0
      %661 = vmatprep.subr.mxu0 0.0
      %662 = vmatpush1.msra.mxu0 0.0
      %663 = vmatprep.subr.mxu0 0.0
      %664 = vmatpush1.msra.mxu0 0.0
      %665 = vmatprep.subr.mxu0 0.0
      %666 = vmatpush1.msra.mxu0 0.0
      %667 = vmatprep.subr.mxu0 0.0
      %668 = vmatpush1.msra.mxu0 0.0
      %669 = vmatprep.subr.mxu0 0.0
      %670 = vmatpush1.msra.mxu0 0.0
      %671 = vmatprep.subr.mxu0 0.0
      %672 = vmatpush1.msra.mxu0 0.0
      %673 = vmatprep.subr.mxu0 0.0
      %674 = vmatpush1.msra.mxu0 0.0
      %675 = vmatprep.subr.mxu0 0.0
      %676 = vmatpush1.msra.mxu0 0.0
      %677 = vmatprep.subr.mxu0 0.0
      %678 = vmatpush1.msra.mxu0 0.0
      %679 = vmatprep.subr.mxu0 0.0
      %680 = vmatpush1.msra.mxu0 0.0
      %681 = vmatprep.mubr.f32.mxu0 0.0
      %682 = vmatmul.mubr.f32.gmra.mrb[0].mxu0 %v615
      %v683 = vpop.f32.mrb[0].mxu0
      %v684 = vadd.f32 0.0, %v683
      %v685 = vpop.f32.mrb[0].mxu0
      %686 = vdwg.mxu0
      %v687 = vadd.f32 %v609, %v684
      %v688 = vadd.f32 %v687, %v454
      %v689 = vmax.f32 %v688, 0.0
      %691 = vrot.lane.b32.xlu0 %v689, 125
      %v692 = vpop.permute.xlu0 %691
      %v694 = vmax.f32 %v689, %v692
      %v695 = vmax.f32 %v461, %v694
      %vm696 = vcmask 19456
      %697 = vst.msk [vmem:[%s205] sm:$0xf] %vm696, %v695
      %p698 = scmp.lt.s32.totalorder %s19, 1
      %s699 = scalar_select %p698, %s19, 1
      %p700 = scmp.lt.s32.totalorder %s20, 0
      %s701 = scalar_select %p700, %s20, 0
      %s702 = sadd.s32 %s701, %s699
      %s703 = smul.addr %s702, 4
      %s704 = scalar_lea.vmem %s3, %s703
      // Predicated region
      $region33: #{tpu_custom_call.1} parent=31 // pred_check
        %p705 = pneg %p117
      $region34: #{tpu_custom_call.1} parent=31 // pred_check_branch
        %707 = sbr.rel (%p705) target = $region36
      $region35: #{tpu_custom_call.1} parent=31 // pred_region
        _
      $region36: #{tpu_custom_call.1} parent=31 // pred_fallthru
        _
    $region32: #{tpu_custom_call.1} parent=5 // pred_fallthru
      _
    %p708 = scmp.le.s32.totalorder 2, %s10
    // Predicated region
    $region37: #{tpu_custom_call.1} parent=5 // pred_check
      %p709 = pneg %p708
    $region38: #{tpu_custom_call.1} parent=5 // pred_check_branch
      %711 = sbr.rel (%p709) target = $region40
    $region39: #{tpu_custom_call.1} parent=5 // pred_region
      %s712 = ssub.s32 %s10, 2
      // Predicated region
      $region41: #{tpu_custom_call.1} parent=39 // pred_check
        %p713 = pneg %p123
      $region42: #{tpu_custom_call.1} parent=39 // pred_check_branch
        %715 = sbr.rel (%p713) target = $region44
      $region43: #{tpu_custom_call.1} parent=39 // pred_region
        %p716 = scmp.lt.s32.totalorder %s21, 1
        %s717 = scalar_select %p716, %s21, 1
        %p718 = scmp.lt.s32.totalorder %s22, 0
        %s719 = scalar_select %p718, %s22, 0
        %s720 = sadd.s32 %s719, %s717
        %s721 = smul.addr %s720, 4
        %s722 = scalar_lea.vmem %s3, %s721
      $region44: #{tpu_custom_call.1} parent=39 // pred_fallthru
        _
    $region40: #{tpu_custom_call.1} parent=5 // pred_fallthru
      _
  $region6: #{tpu_custom_call.1} parent=0 // loop_footer
    %s14 = sadd.s32 1, %s10
  $region7: #{tpu_custom_call.1} parent=0 // loop_footer_branch
    %9 = sbr.rel target = $region3
  $region8: #{tpu_custom_call.1} parent=0 // loop_exit
    _

// kernel: tpu_custom_call.1
$region0: #{tpu_custom_call.1}
  #allocation0 [shape = 'u32[]', space=smem, size = 0x4, offset = 0x4, fixed_abs, tag = 'smem constant byte address 0x4 - core index']
  #allocation1 [shape = 'u32[144,128]{1,0:T(1,128)}', space=vmem, size = 0x12000, scoped, tag = 'internal scratch']
  #allocation2 [shape = 'f32[1]{0:T(128)S(6)}', space=smem, size = 0x200, scoped, tag = 'scoped memory for tpu_custom_call.1']
  %s0 = inlined_call_operand.vmem [shape: f32[2,1,18,18], index: 0, kind: input, shape index: {}]
  %s1 = inlined_call_operand.vmem [shape: f32[3,18,6], index: 1, kind: input, shape index: {}]
  %s2 = inlined_call_operand.<no memory space> [shape: f32[1], index: 2, kind: input, shape index: {}]
  %s3 = inlined_call_operand.vmem [shape: f32[2,1,4,3], index: 3, kind: output, shape index: {}]
  %s4 = sld [smem:[#allocation0]]
  $region45: #{tpu_custom_call.1} parent=0
    _
  %s6 = ssub.s32 1, %s4
  %s7 = scalar_select 0, %s6, %s4
  %8 = sst [smem:[#allocation2]] %s2
  loop: start=0, step=1, limit=4
  $region2: #{tpu_custom_call.1} parent=0 // loop_pre_header
    _
  $region3: #{tpu_custom_call.1} parent=0 // loop_header
    %s10 = sphi 0, %s14
    %p11 = scmp.ge.s32.totalorder %s10, 4
    %s17 = sphi 0, %s29
    %s18 = sphi 0, %s25
    %s19 = sphi 0, %s17
    %s20 = sphi 0, %s18
    %s21 = sphi 0, %s19
    %s22 = sphi 0, %s20
    %s34 = sphi 0, %s36
    %s37 = sphi 0, %s34
    %s38 = sphi 0, %s37
    %s54 = sphi 0, %s38
    %s58 = sphi 0, %s58
    %s60 = sphi 0, %s58
    %s61 = sphi 0, %s60
    %s75 = sphi 0, %s61
    %s79 = sphi 0, %s79
    %s81 = sphi 0, %s79
    %s82 = sphi 0, %s81
    %s96 = sphi 0, %s82
    %s104 = sphi 0, %s106
    %s107 = sphi 0, %s104
    %s108 = sphi 0, %s107
    %s124 = sphi 0, %s108
  $region4: #{tpu_custom_call.1} parent=0 // loop_header_branch
    %13 = sbr.rel (%p11) target = $region8
  $region5: #{tpu_custom_call.1} parent=0 // loop_body
    %s15 = ssub.s32 %s10, 1
    %s16 = ssub.s32 %s10, 2
    %s23 = sadd.s32 1, %s18
    %p24 = scmp.ge.s32.totalorder %s23, 1
    %s25 = scalar_select %p24, 0, %s23
    %s26 = sadd.s32 1, %s17
    %s27 = scalar_select %p24, %s26, %s17
    %p28 = scmp.ge.s32.totalorder %s27, 2
    %s29 = scalar_select %p28, 0, %s27
    %s30 = ssub.s32 %s17, %s29
    %s31 = ssub.s32 %s18, %s25
    %s32 = sor.u32 %s30, %s31
    %p33 = scmp.eq.s32.totalorder %s32, 0
    %s35 = sadd.s32 %s34, 1
    %s36 = scalar_select %p33, %s34, %s35
    %p39 = pneg %p33
    %p40 = scmp.eq.s32.totalorder %s10, 1
    %p41 = por %p39, %p40
    %p42 = scmp.ne.s32.totalorder %s34, %s37
    %p43 = scmp.eq.s32.totalorder %s10, 0
    %p44 = por %p42, %p43
    %p45 = scmp.ne.s32.totalorder %s34, %s37
    %p46 = scmp.eq.s32.totalorder %s15, 1
    %p47 = por %p45, %p46
    %p48 = scmp.ne.s32.totalorder %s37, %s38
    %p49 = scmp.eq.s32.totalorder %s15, 0
    %p50 = por %p48, %p49
    %p51 = scmp.ne.s32.totalorder %s37, %s38
    %p52 = scmp.eq.s32.totalorder %s16, 1
    %p53 = por %p51, %p52
    %p55 = scmp.ne.s32.totalorder %s38, %s54
    %p56 = scmp.eq.s32.totalorder %s16, 0
    %p57 = por %p55, %p56
    %s59 = sadd.s32 %s58, 1
    %p62 = scmp.eq.s32.totalorder %s10, 1
    %p63 = scmp.ne.s32.totalorder %s58, %s60
    %p64 = scmp.eq.s32.totalorder %s10, 0
    %p65 = por %p63, %p64
    %p66 = scmp.ne.s32.totalorder %s58, %s60
    %p67 = scmp.eq.s32.totalorder %s15, 1
    %p68 = por %p66, %p67
    %p69 = scmp.ne.s32.totalorder %s60, %s61
    %p70 = scmp.eq.s32.totalorder %s15, 0
    %p71 = por %p69, %p70
    %p72 = scmp.ne.s32.totalorder %s60, %s61
    %p73 = scmp.eq.s32.totalorder %s16, 1
    %p74 = por %p72, %p73
    %p76 = scmp.ne.s32.totalorder %s61, %s75
    %p77 = scmp.eq.s32.totalorder %s16, 0
    %p78 = por %p76, %p77
    %s80 = sadd.s32 %s79, 1
    %p83 = scmp.eq.s32.totalorder %s10, 1
    %p84 = scmp.ne.s32.totalorder %s79, %s81
    %p85 = scmp.eq.s32.totalorder %s10, 0
    %p86 = por %p84, %p85
    %p87 = scmp.ne.s32.totalorder %s79, %s81
    %p88 = scmp.eq.s32.totalorder %s15, 1
    %p89 = por %p87, %p88
    %p90 = scmp.ne.s32.totalorder %s81, %s82
    %p91 = scmp.eq.s32.totalorder %s15, 0
    %p92 = por %p90, %p91
    %p93 = scmp.ne.s32.totalorder %s81, %s82
    %p94 = scmp.eq.s32.totalorder %s16, 1
    %p95 = por %p93, %p94
    %p97 = scmp.ne.s32.totalorder %s82, %s96
    %p98 = scmp.eq.s32.totalorder %s16, 0
    %p99 = por %p97, %p98
    %s100 = ssub.s32 %s17, %s29
    %s101 = ssub.s32 %s18, %s25
    %s102 = sor.u32 %s100, %s101
    %p103 = scmp.eq.s32.totalorder %s102, 0
    %s105 = sadd.s32 %s104, 1
    %s106 = scalar_select %p103, %s104, %s105
    %p109 = pneg %p103
    %p110 = scmp.eq.s32.totalorder %s10, 1
    %p111 = por %p109, %p110
    %p112 = scmp.ne.s32.totalorder %s104, %s107
    %p113 = scmp.eq.s32.totalorder %s10, 0
    %p114 = por %p112, %p113
    %p115 = scmp.ne.s32.totalorder %s104, %s107
    %p116 = scmp.eq.s32.totalorder %s15, 1
    %p117 = por %p115, %p116
    %p118 = scmp.ne.s32.totalorder %s107, %s108
    %p119 = scmp.eq.s32.totalorder %s15, 0
    %p120 = por %p118, %p119
    %p121 = scmp.ne.s32.totalorder %s107, %s108
    %p122 = scmp.eq.s32.totalorder %s16, 1
    %p123 = por %p121, %p122
    %p125 = scmp.ne.s32.totalorder %s108, %s124
    %p126 = scmp.eq.s32.totalorder %s16, 0
    %p127 = por %p125, %p126
    %p128 = scmp.le.s32.totalorder 1, %s10
    %p129 = scmp.lt.s32.totalorder %s10, 3
    %p130 = pnand %p128, %p129
    %p131 = pneg %p130
    // Predicated region
    $region9: #{tpu_custom_call.1} parent=5 // pred_check
      _
    $region10: #{tpu_custom_call.1} parent=5 // pred_check_branch
      %133 = sbr.rel (%p130) target = $region12
    $region11: #{tpu_custom_call.1} parent=5 // pred_region
      %s134 = ssub.s32 %s10, 1
      // Predicated region
      $region13: #{tpu_custom_call.1} parent=11 // pred_check
        %p135 = pneg %p71
      $region14: #{tpu_custom_call.1} parent=11 // pred_check_branch
        %137 = sbr.rel (%p135) target = $region16
      $region15: #{tpu_custom_call.1} parent=11 // pred_region
        _
      $region16: #{tpu_custom_call.1} parent=11 // pred_fallthru
        _
      // Predicated region
      $region17: #{tpu_custom_call.1} parent=11 // pred_check
        %p138 = pneg %p92
      $region18: #{tpu_custom_call.1} parent=11 // pred_check_branch
        %140 = sbr.rel (%p138) target = $region20
      $region19: #{tpu_custom_call.1} parent=11 // pred_region
        _
      $region20: #{tpu_custom_call.1} parent=11 // pred_fallthru
        _
    $region12: #{tpu_custom_call.1} parent=5 // pred_fallthru
      _
    %p141 = scmp.lt.s32.totalorder %s10, 2
    // Predicated region
    $region21: #{tpu_custom_call.1} parent=5 // pred_check
      %p142 = pneg %p141
    $region22: #{tpu_custom_call.1} parent=5 // pred_check_branch
      %144 = sbr.rel (%p142) target = $region24
    $region23: #{tpu_custom_call.1} parent=5 // pred_region
      // Predicated region
      $region25: #{tpu_custom_call.1} parent=23 // pred_check
        %p145 = pneg %p44
      $region26: #{tpu_custom_call.1} parent=23 // pred_check_branch
        %147 = sbr.rel (%p145) target = $region28
      $region27: #{tpu_custom_call.1} parent=23 // pred_region
        %s148 = smul.u32 3, %s18
        %p149 = scmp.lt.s32.totalorder %s17, 1
        %s150 = scalar_select %p149, %s17, 1
        %p151 = scmp.lt.s32.totalorder %s148, 2
        %s152 = scalar_select %p151, %s148, 2
        %s153 = smul.addr %s150, 3
        %s154 = sadd.s32 %s152, %s153
        %s155 = smul.addr %s154, 8
        %s156 = scalar_lea.vmem %s0, %s155
        %s157 = smul.u32 3, %s18
      $region28: #{tpu_custom_call.1} parent=23 // pred_fallthru
        _
    $region24: #{tpu_custom_call.1} parent=5 // pred_fallthru
      _
    %p158 = scmp.le.s32.totalorder 1, %s10
    %p159 = scmp.lt.s32.totalorder %s10, 3
    %p160 = pnand %p158, %p159
    %p161 = pneg %p160
    // Predicated region
    $region29: #{tpu_custom_call.1} parent=5 // pred_check
      _
    $region30: #{tpu_custom_call.1} parent=5 // pred_check_branch
      %163 = sbr.rel (%p160) target = $region32
    $region31: #{tpu_custom_call.1} parent=5 // pred_region
      %s164 = ssub.s32 %s10, 1
      %s165 = smul.u32 3, %s20
      %p166 = scmp.lt.s32.totalorder %s19, 1
      %s167 = scalar_select %p166, %s19, 1
      %p168 = scmp.lt.s32.totalorder %s165, 2
      %s169 = scalar_select %p168, %s165, 2
      %s170 = smul.addr %s167, 3
      %s171 = sadd.s32 %s169, %s170
      %s172 = smul.addr %s171, 8
      %s173 = scalar_lea.vmem %s0, %s172
      %p174 = pneg %p50
      %p175 = pneg %p47
      %p176 = pneg %p71
      %p177 = pneg %p68
      %p178 = pneg %p92
      %p179 = pneg %p89
      %p180 = pneg %p120
      %p181 = pneg %p117
      %p182 = scmp.lt.s32.totalorder %s19, 1
      %s183 = scalar_select %p182, %s19, 1
      %p184 = scmp.lt.s32.totalorder %s20, 0
      %s185 = scalar_select %p184, %s20, 0
      %s186 = sadd.s32 %s185, %s183
      %s187 = smul.addr %s186, 4
      %s188 = scalar_lea.vmem %s3, %s187
      %s189 = smul.u32 3, %s20
      %p190 = scmp.lt.s32.totalorder %s19, 1
      %s191 = scalar_select %p190, %s19, 1
      %p192 = scmp.lt.s32.totalorder %s189, 2
      %s193 = scalar_select %p192, %s189, 2
      %s194 = smul.addr %s191, 3
      %s195 = sadd.s32 %s193, %s194
      %s196 = smul.addr %s195, 8
      %s197 = scalar_lea.vmem %s0, %s196
      %s198 = smul.u32 3, %s20
      %p199 = scmp.lt.s32.totalorder %s19, 1
      %s200 = scalar_select %p199, %s19, 1
      %p201 = scmp.lt.s32.totalorder %s20, 0
      %s202 = scalar_select %p201, %s20, 0
      %s203 = sadd.s32 %s202, %s200
      %s204 = smul.addr %s203, 4
      %s205 = scalar_lea.vmem %s3, %s204
      %s206 = sld [smem:[#allocation2]]
      %v207 = vld [vmem:[%s197] sm:$0xff]
      %v208 = vld [vmem:[%s197 + $0x8] sm:$0xff]
      %v209 = vld [vmem:[%s197 + $0x10] sm:$0xff]
      %v210 = vlaneseq
      %v211 = vshrl.u32 %v210, 7
      %v212 = vadd.s32 %v211, 8
      %v213 = vadd.s32 %v211, 16
      %s214 = smul.u32 %s20, 24
      %s215 = ssub.s32 18, %s214
      %v216 = vstv %s215
      %vm217 = vcmp.lt.s32.totalorder %v211, %v216
      %vm218 = vcmp.lt.s32.totalorder %v212, %v216
      %vm219 = vcmp.lt.s32.totalorder %v213, %v216
      %v220 = vsel %vm217, %v207, 0.0
      %v221 = vsel %vm218, %v208, 0.0
      %v222 = vsel %vm219, %v209, 0.0
      %v223 = vlaneseq
      %v224 = vand.u32 %v223, 127
      %v225 = vmul.u32 %v211, 6
      %vm226 = vcmp.eq.s32.totalorder %v224, %v225
      %v227 = vsel %vm226, 1, 0
      %v228 = vcvt.s32.f32 %v227
      %vm229 = vcmask 195584
      %v231 = vsel %vm229, %v228, 0
      %233 = vmatprep.subr.mxu0 0.0
      %234 = vmatpush1.msra.mxu0 %v220
      %235 = vmatprep.subr.mxu0 0.0
      %236 = vmatpush1.msra.mxu0 %v221
      %237 = vmatprep.subr.mxu0 0.0
      %238 = vmatpush1.msra.mxu0 %v222
      %239 = vmatprep.subr.mxu0 0.0
      %240 = vmatpush1.msra.mxu0 0.0
      %241 = vmatprep.subr.mxu0 0.0
      %242 = vmatpush1.msra.mxu0 0.0
      %243 = vmatprep.subr.mxu0 0.0
      %244 = vmatpush1.msra.mxu0 0.0
      %245 = vmatprep.subr.mxu0 0.0
      %246 = vmatpush1.msra.mxu0 0.0
      %247 = vmatprep.subr.mxu0 0.0
      %248 = vmatpush1.msra.mxu0 0.0
      %249 = vmatprep.subr.mxu0 0.0
      %250 = vmatpush1.msra.mxu0 0.0
      %251 = vmatprep.subr.mxu0 0.0
      %252 = vmatpush1.msra.mxu0 0.0
      %253 = vmatprep.subr.mxu0 0.0
      %254 = vmatpush1.msra.mxu0 0.0
      %255 = vmatprep.subr.mxu0 0.0
      %256 = vmatpush1.msra.mxu0 0.0
      %257 = vmatprep.subr.mxu0 0.0
      %258 = vmatpush1.msra.mxu0 0.0
      %259 = vmatprep.subr.mxu0 0.0
      %260 = vmatpush1.msra.mxu0 0.0
      %261 = vmatprep.subr.mxu0 0.0
      %262 = vmatpush1.msra.mxu0 0.0
      %263 = vmatprep.subr.mxu0 0.0
      %264 = vmatpush1.msra.mxu0 0.0
      %265 = vmatprep.subr.mxu0 0.0
      %266 = vmatpush1.msra.mxu0 0.0
      %267 = vmatprep.subr.mxu0 0.0
      %268 = vmatpush1.msra.mxu0 0.0
      %269 = vmatprep.subr.mxu0 0.0
      %270 = vmatpush1.msra.mxu0 0.0
      %271 = vmatprep.subr.mxu0 0.0
      %272 = vmatpush1.msra.mxu0 0.0
      %273 = vmatprep.subr.mxu0 0.0
      %274 = vmatpush1.msra.mxu0 0.0
      %275 = vmatprep.subr.mxu0 0.0
      %276 = vmatpush1.msra.mxu0 0.0
      %277 = vmatprep.subr.mxu0 0.0
      %278 = vmatpush1.msra.mxu0 0.0
      %279 = vmatprep.subr.mxu0 0.0
      %280 = vmatpush1.msra.mxu0 0.0
      %281 = vmatprep.subr.mxu0 0.0
      %282 = vmatpush1.msra.mxu0 0.0
      %283 = vmatprep.subr.mxu0 0.0
      %284 = vmatpush1.msra.mxu0 0.0
      %285 = vmatprep.subr.mxu0 0.0
      %286 = vmatpush1.msra.mxu0 0.0
      %287 = vmatprep.subr.mxu0 0.0
      %288 = vmatpush1.msra.mxu0 0.0
      %289 = vmatprep.subr.mxu0 0.0
      %290 = vmatpush1.msra.mxu0 0.0
      %291 = vmatprep.subr.mxu0 0.0
      %292 = vmatpush1.msra.mxu0 0.0
      %293 = vmatprep.subr.mxu0 0.0
      %294 = vmatpush1.msra.mxu0 0.0
      %295 = vmatprep.subr.mxu0 0.0
      %296 = vmatpush1.msra.mxu0 0.0
      %297 = vmatprep.mubr.f32.mxu0 0.0
      %298 = vmatmul.mubr.f32.gmra.mrb[0].mxu0 %v231
      %v299 = vpop.f32.mrb[0].mxu0
      %v300 = vadd.f32 0.0, %v299
      %v301 = vpop.f32.mrb[0].mxu0
      %302 = vdwg.mxu0
      %v303 = vld [vmem:[%s1] sm:$0xff]
      %v304 = vld [vmem:[%s1 + $0x8] sm:$0xff]
      %v305 = vld [vmem:[%s1 + $0x10] sm:$0x3]
      %v306 = vadd.s32 %v225, 1
      %vm307 = vcmp.eq.s32.totalorder %v224, %v306
      %v308 = vsel %vm307, 1, 0
      %v309 = vcvt.s32.f32 %v308
      %v311 = vsel %vm229, %v309, 0
      %313 = vmatprep.subr.mxu0 0.0
      %314 = vmatpush1.msra.mxu0 %v220
      %315 = vmatprep.subr.mxu0 0.0
      %316 = vmatpush1.msra.mxu0 %v221
      %317 = vmatprep.subr.mxu0 0.0
      %318 = vmatpush1.msra.mxu0 %v222
      %319 = vmatprep.subr.mxu0 0.0
      %320 = vmatpush1.msra.mxu0 0.0
      %321 = vmatprep.subr.mxu0 0.0
      %322 = vmatpush1.msra.mxu0 0.0
      %323 = vmatprep.subr.mxu0 0.0
      %324 = vmatpush1.msra.mxu0 0.0
      %325 = vmatprep.subr.mxu0 0.0
      %326 = vmatpush1.msra.mxu0 0.0
      %327 = vmatprep.subr.mxu0 0.0
      %328 = vmatpush1.msra.mxu0 0.0
      %329 = vmatprep.subr.mxu0 0.0
      %330 = vmatpush1.msra.mxu0 0.0
      %331 = vmatprep.subr.mxu0 0.0
      %332 = vmatpush1.msra.mxu0 0.0
      %333 = vmatprep.subr.mxu0 0.0
      %334 = vmatpush1.msra.mxu0 0.0
      %335 = vmatprep.subr.mxu0 0.0
      %336 = vmatpush1.msra.mxu0 0.0
      %337 = vmatprep.subr.mxu0 0.0
      %338 = vmatpush1.msra.mxu0 0.0
      %339 = vmatprep.subr.mxu0 0.0
      %340 = vmatpush1.msra.mxu0 0.0
      %341 = vmatprep.subr.mxu0 0.0
      %342 = vmatpush1.msra.mxu0 0.0
      %343 = vmatprep.subr.mxu0 0.0
      %344 = vmatpush1.msra.mxu0 0.0
      %345 = vmatprep.subr.mxu0 0.0
      %346 = vmatpush1.msra.mxu0 0.0
      %347 = vmatprep.subr.mxu0 0.0
      %348 = vmatpush1.msra.mxu0 0.0
      %349 = vmatprep.subr.mxu0 0.0
      %350 = vmatpush1.msra.mxu0 0.0
      %351 = vmatprep.subr.mxu0 0.0
      %352 = vmatpush1.msra.mxu0 0.0
      %353 = vmatprep.subr.mxu0 0.0
      %354 = vmatpush1.msra.mxu0 0.0
      %355 = vmatprep.subr.mxu0 0.0
      %356 = vmatpush1.msra.mxu0 0.0
      %357 = vmatprep.subr.mxu0 0.0
      %358 = vmatpush1.msra.mxu0 0.0
      %359 = vmatprep.subr.mxu0 0.0
      %360 = vmatpush1.msra.mxu0 0.0
      %361 = vmatprep.subr.mxu0 0.0
      %362 = vmatpush1.msra.mxu0 0.0
      %363 = vmatprep.subr.mxu0 0.0
      %364 = vmatpush1.msra.mxu0 0.0
      %365 = vmatprep.subr.mxu0 0.0
      %366 = vmatpush1.msra.mxu0 0.0
      %367 = vmatprep.subr.mxu0 0.0
      %368 = vmatpush1.msra.mxu0 0.0
      %369 = vmatprep.subr.mxu0 0.0
      %370 = vmatpush1.msra.mxu0 0.0
      %371 = vmatprep.subr.mxu0 0.0
      %372 = vmatpush1.msra.mxu0 0.0
      %373 = vmatprep.subr.mxu0 0.0
      %374 = vmatpush1.msra.mxu0 0.0
      %375 = vmatprep.subr.mxu0 0.0
      %376 = vmatpush1.msra.mxu0 0.0
      %377 = vmatprep.mubr.f32.mxu0 0.0
      %378 = vmatmul.mubr.f32.gmra.mrb[0].mxu0 %v311
      %v379 = vpop.f32.mrb[0].mxu0
      %v380 = vadd.f32 0.0, %v379
      %v381 = vpop.f32.mrb[0].mxu0
      %382 = vdwg.mxu0
      %s383 = scalar_lea.vmem %s1, 24
      %v384 = vld [vmem:[%s383] sm:$0xff]
      %v385 = vld [vmem:[%s383 + $0x8] sm:$0xff]
      %v386 = vld [vmem:[%s383 + $0x10] sm:$0x3]
      %vm387 = vcmask 146432
      %v389 = vsel %vm387, %v380, 0
      %vm391 = vcmask 1041408
      %v393 = vsel %vm391, %v386, 0
      %395 = vmatprep.subr.mxu0 0.0
      %396 = vmatpush1.msra.mxu0 %v384
      %397 = vmatprep.subr.mxu0 0.0
      %398 = vmatpush1.msra.mxu0 %v385
      %399 = vmatprep.subr.mxu0 0.0
      %400 = vmatpush1.msra.mxu0 %v393
      %401 = vmatprep.subr.mxu0 0.0
      %402 = vmatpush1.msra.mxu0 0.0
      %403 = vmatprep.subr.mxu0 0.0
      %404 = vmatpush1.msra.mxu0 0.0
      %405 = vmatprep.subr.mxu0 0.0
      %406 = vmatpush1.msra.mxu0 0.0
      %407 = vmatprep.subr.mxu0 0.0
      %408 = vmatpush1.msra.mxu0 0.0
      %409 = vmatprep.subr.mxu0 0.0
      %410 = vmatpush1.msra.mxu0 0.0
      %411 = vmatprep.subr.mxu0 0.0
      %412 = vmatpush1.msra.mxu0 0.0
      %413 = vmatprep.subr.mxu0 0.0
      %414 = vmatpush1.msra.mxu0 0.0
      %415 = vmatprep.subr.mxu0 0.0
      %416 = vmatpush1.msra.mxu0 0.0
      %417 = vmatprep.subr.mxu0 0.0
      %418 = vmatpush1.msra.mxu0 0.0
      %419 = vmatprep.subr.mxu0 0.0
      %420 = vmatpush1.msra.mxu0 0.0
      %421 = vmatprep.subr.mxu0 0.0
      %422 = vmatpush1.msra.mxu0 0.0
      %423 = vmatprep.subr.mxu0 0.0
      %424 = vmatpush1.msra.mxu0 0.0
      %425 = vmatprep.subr.mxu0 0.0
      %426 = vmatpush1.msra.mxu0 0.0
      %427 = vmatprep.subr.mxu0 0.0
      %428 = vmatpush1.msra.mxu0 0.0
      %429 = vmatprep.subr.mxu0 0.0
      %430 = vmatpush1.msra.mxu0 0.0
      %431 = vmatprep.subr.mxu0 0.0
      %432 = vmatpush1.msra.mxu0 0.0
      %433 = vmatprep.subr.mxu0 0.0
      %434 = vmatpush1.msra.mxu0 0.0
      %435 = vmatprep.subr.mxu0 0.0
      %436 = vmatpush1.msra.mxu0 0.0
      %437 = vmatprep.subr.mxu0 0.0
      %438 = vmatpush1.msra.mxu0 0.0
      %439 = vmatprep.subr.mxu0 0.0
      %440 = vmatpush1.msra.mxu0 0.0
      %441 = vmatprep.subr.mxu0 0.0
      %442 = vmatpush1.msra.mxu0 0.0
      %443 = vmatprep.subr.mxu0 0.0
      %444 = vmatpush1.msra.mxu0 0.0
      %445 = vmatprep.subr.mxu0 0.0
      %446 = vmatpush1.msra.mxu0 0.0
      %447 = vmatprep.subr.mxu0 0.0
      %448 = vmatpush1.msra.mxu0 0.0
      %449 = vmatprep.subr.mxu0 0.0
      %450 = vmatpush1.msra.mxu0 0.0
      %451 = vmatprep.subr.mxu0 0.0
      %452 = vmatpush1.msra.mxu0 0.0
      %453 = vmatprep.subr.mxu0 0.0
      %454 = vmatpush1.msra.mxu0 0.0
      %455 = vmatprep.subr.mxu0 0.0
      %456 = vmatpush1.msra.mxu0 0.0
      %457 = vmatprep.subr.mxu0 0.0
      %458 = vmatpush1.msra.mxu0 0.0
      %459 = vmatprep.mubr.f32.mxu0 0.0
      %460 = vmatmul.mubr.f32.gmra.mrb[0].mxu0 %v389
      %v461 = vpop.f32.mrb[0].mxu0
      %v462 = vadd.f32 0.0, %v461
      %v463 = vpop.f32.mrb[0].mxu0
      %464 = vdwg.mxu0
      %v466 = vsel %vm387, %v300, 0
      %v469 = vsel %vm391, %v305, 0
      %471 = vmatprep.subr.mxu0 0.0
      %472 = vmatpush1.msra.mxu0 %v303
      %473 = vmatprep.subr.mxu0 0.0
      %474 = vmatpush1.msra.mxu0 %v304
      %475 = vmatprep.subr.mxu0 0.0
      %476 = vmatpush1.msra.mxu0 %v469
      %477 = vmatprep.subr.mxu0 0.0
      %478 = vmatpush1.msra.mxu0 0.0
      %479 = vmatprep.subr.mxu0 0.0
      %480 = vmatpush1.msra.mxu0 0.0
      %481 = vmatprep.subr.mxu0 0.0
      %482 = vmatpush1.msra.mxu0 0.0
      %483 = vmatprep.subr.mxu0 0.0
      %484 = vmatpush1.msra.mxu0 0.0
      %485 = vmatprep.subr.mxu0 0.0
      %486 = vmatpush1.msra.mxu0 0.0
      %487 = vmatprep.subr.mxu0 0.0
      %488 = vmatpush1.msra.mxu0 0.0
      %489 = vmatprep.subr.mxu0 0.0
      %490 = vmatpush1.msra.mxu0 0.0
      %491 = vmatprep.subr.mxu0 0.0
      %492 = vmatpush1.msra.mxu0 0.0
      %493 = vmatprep.subr.mxu0 0.0
      %494 = vmatpush1.msra.mxu0 0.0
      %495 = vmatprep.subr.mxu0 0.0
      %496 = vmatpush1.msra.mxu0 0.0
      %497 = vmatprep.subr.mxu0 0.0
      %498 = vmatpush1.msra.mxu0 0.0
      %499 = vmatprep.subr.mxu0 0.0
      %500 = vmatpush1.msra.mxu0 0.0
      %501 = vmatprep.subr.mxu0 0.0
      %502 = vmatpush1.msra.mxu0 0.0
      %503 = vmatprep.subr.mxu0 0.0
      %504 = vmatpush1.msra.mxu0 0.0
      %505 = vmatprep.subr.mxu0 0.0
      %506 = vmatpush1.msra.mxu0 0.0
      %507 = vmatprep.subr.mxu0 0.0
      %508 = vmatpush1.msra.mxu0 0.0
      %509 = vmatprep.subr.mxu0 0.0
      %510 = vmatpush1.msra.mxu0 0.0
      %511 = vmatprep.subr.mxu0 0.0
      %512 = vmatpush1.msra.mxu0 0.0
      %513 = vmatprep.subr.mxu0 0.0
      %514 = vmatpush1.msra.mxu0 0.0
      %515 = vmatprep.subr.mxu0 0.0
      %516 = vmatpush1.msra.mxu0 0.0
      %517 = vmatprep.subr.mxu0 0.0
      %518 = vmatpush1.msra.mxu0 0.0
      %519 = vmatprep.subr.mxu0 0.0
      %520 = vmatpush1.msra.mxu0 0.0
      %521 = vmatprep.subr.mxu0 0.0
      %522 = vmatpush1.msra.mxu0 0.0
      %523 = vmatprep.subr.mxu0 0.0
      %524 = vmatpush1.msra.mxu0 0.0
      %525 = vmatprep.subr.mxu0 0.0
      %526 = vmatpush1.msra.mxu0 0.0
      %527 = vmatprep.subr.mxu0 0.0
      %528 = vmatpush1.msra.mxu0 0.0
      %529 = vmatprep.subr.mxu0 0.0
      %530 = vmatpush1.msra.mxu0 0.0
      %531 = vmatprep.subr.mxu0 0.0
      %532 = vmatpush1.msra.mxu0 0.0
      %533 = vmatprep.subr.mxu0 0.0
      %534 = vmatpush1.msra.mxu0 0.0
      %535 = vmatprep.mubr.f32.mxu0 0.0
      %536 = vmatmul.mubr.f32.gmra.mrb[0].mxu0 %v466
      %v537 = vpop.f32.mrb[0].mxu0
      %v538 = vadd.f32 %v462, %v537
      %v539 = vpop.f32.mrb[0].mxu0
      %540 = vdwg.mxu0
      %v541 = vadd.s32 %v225, 2
      %vm542 = vcmp.eq.s32.totalorder %v224, %v541
      %v543 = vsel %vm542, 1, 0
      %v544 = vcvt.s32.f32 %v543
      %v546 = vsel %vm229, %v544, 0
      %548 = vmatprep.subr.mxu0 0.0
      %549 = vmatpush1.msra.mxu0 %v220
      %550 = vmatprep.subr.mxu0 0.0
      %551 = vmatpush1.msra.mxu0 %v221
      %552 = vmatprep.subr.mxu0 0.0
      %553 = vmatpush1.msra.mxu0 %v222
      %554 = vmatprep.subr.mxu0 0.0
      %555 = vmatpush1.msra.mxu0 0.0
      %556 = vmatprep.subr.mxu0 0.0
      %557 = vmatpush1.msra.mxu0 0.0
      %558 = vmatprep.subr.mxu0 0.0
      %559 = vmatpush1.msra.mxu0 0.0
      %560 = vmatprep.subr.mxu0 0.0
      %561 = vmatpush1.msra.mxu0 0.0
      %562 = vmatprep.subr.mxu0 0.0
      %563 = vmatpush1.msra.mxu0 0.0
      %564 = vmatprep.subr.mxu0 0.0
      %565 = vmatpush1.msra.mxu0 0.0
      %566 = vmatprep.subr.mxu0 0.0
      %567 = vmatpush1.msra.mxu0 0.0
      %568 = vmatprep.subr.mxu0 0.0
      %569 = vmatpush1.msra.mxu0 0.0
      %570 = vmatprep.subr.mxu0 0.0
      %571 = vmatpush1.msra.mxu0 0.0
      %572 = vmatprep.subr.mxu0 0.0
      %573 = vmatpush1.msra.mxu0 0.0
      %574 = vmatprep.subr.mxu0 0.0
      %575 = vmatpush1.msra.mxu0 0.0
      %576 = vmatprep.subr.mxu0 0.0
      %577 = vmatpush1.msra.mxu0 0.0
      %578 = vmatprep.subr.mxu0 0.0
      %579 = vmatpush1.msra.mxu0 0.0
      %580 = vmatprep.subr.mxu0 0.0
      %581 = vmatpush1.msra.mxu0 0.0
      %582 = vmatprep.subr.mxu0 0.0
      %583 = vmatpush1.msra.mxu0 0.0
      %584 = vmatprep.subr.mxu0 0.0
      %585 = vmatpush1.msra.mxu0 0.0
      %586 = vmatprep.subr.mxu0 0.0
      %587 = vmatpush1.msra.mxu0 0.0
      %588 = vmatprep.subr.mxu0 0.0
      %589 = vmatpush1.msra.mxu0 0.0
      %590 = vmatprep.subr.mxu0 0.0
      %591 = vmatpush1.msra.mxu0 0.0
      %592 = vmatprep.subr.mxu0 0.0
      %593 = vmatpush1.msra.mxu0 0.0
      %594 = vmatprep.subr.mxu0 0.0
      %595 = vmatpush1.msra.mxu0 0.0
      %596 = vmatprep.subr.mxu0 0.0
      %597 = vmatpush1.msra.mxu0 0.0
      %598 = vmatprep.subr.mxu0 0.0
      %599 = vmatpush1.msra.mxu0 0.0
      %600 = vmatprep.subr.mxu0 0.0
      %601 = vmatpush1.msra.mxu0 0.0
      %602 = vmatprep.subr.mxu0 0.0
      %603 = vmatpush1.msra.mxu0 0.0
      %604 = vmatprep.subr.mxu0 0.0
      %605 = vmatpush1.msra.mxu0 0.0
      %606 = vmatprep.subr.mxu0 0.0
      %607 = vmatpush1.msra.mxu0 0.0
      %608 = vmatprep.subr.mxu0 0.0
      %609 = vmatpush1.msra.mxu0 0.0
      %610 = vmatprep.subr.mxu0 0.0
      %611 = vmatpush1.msra.mxu0 0.0
      %612 = vmatprep.mubr.f32.mxu0 0.0
      %613 = vmatmul.mubr.f32.gmra.mrb[0].mxu0 %v546
      %v614 = vpop.f32.mrb[0].mxu0
      %v615 = vadd.f32 0.0, %v614
      %v616 = vpop.f32.mrb[0].mxu0
      %617 = vdwg.mxu0
      %s618 = scalar_lea.vmem %s1, 48
      %v619 = vld [vmem:[%s618] sm:$0xff]
      %v620 = vld [vmem:[%s618 + $0x8] sm:$0xff]
      %v621 = vld [vmem:[%s618 + $0x10] sm:$0x3]
      %v623 = vsel %vm387, %v615, 0
      %v626 = vsel %vm391, %v621, 0
      %628 = vmatprep.subr.mxu0 0.0
      %629 = vmatpush1.msra.mxu0 %v619
      %630 = vmatprep.subr.mxu0 0.0
      %631 = vmatpush1.msra.mxu0 %v620
      %632 = vmatprep.subr.mxu0 0.0
      %633 = vmatpush1.msra.mxu0 %v626
      %634 = vmatprep.subr.mxu0 0.0
      %635 = vmatpush1.msra.mxu0 0.0
      %636 = vmatprep.subr.mxu0 0.0
      %637 = vmatpush1.msra.mxu0 0.0
      %638 = vmatprep.subr.mxu0 0.0
      %639 = vmatpush1.msra.mxu0 0.0
      %640 = vmatprep.subr.mxu0 0.0
      %641 = vmatpush1.msra.mxu0 0.0
      %642 = vmatprep.subr.mxu0 0.0
      %643 = vmatpush1.msra.mxu0 0.0
      %644 = vmatprep.subr.mxu0 0.0
      %645 = vmatpush1.msra.mxu0 0.0
      %646 = vmatprep.subr.mxu0 0.0
      %647 = vmatpush1.msra.mxu0 0.0
      %648 = vmatprep.subr.mxu0 0.0
      %649 = vmatpush1.msra.mxu0 0.0
      %650 = vmatprep.subr.mxu0 0.0
      %651 = vmatpush1.msra.mxu0 0.0
      %652 = vmatprep.subr.mxu0 0.0
      %653 = vmatpush1.msra.mxu0 0.0
      %654 = vmatprep.subr.mxu0 0.0
      %655 = vmatpush1.msra.mxu0 0.0
      %656 = vmatprep.subr.mxu0 0.0
      %657 = vmatpush1.msra.mxu0 0.0
      %658 = vmatprep.subr.mxu0 0.0
      %659 = vmatpush1.msra.mxu0 0.0
      %660 = vmatprep.subr.mxu0 0.0
      %661 = vmatpush1.msra.mxu0 0.0
      %662 = vmatprep.subr.mxu0 0.0
      %663 = vmatpush1.msra.mxu0 0.0
      %664 = vmatprep.subr.mxu0 0.0
      %665 = vmatpush1.msra.mxu0 0.0
      %666 = vmatprep.subr.mxu0 0.0
      %667 = vmatpush1.msra.mxu0 0.0
      %668 = vmatprep.subr.mxu0 0.0
      %669 = vmatpush1.msra.mxu0 0.0
      %670 = vmatprep.subr.mxu0 0.0
      %671 = vmatpush1.msra.mxu0 0.0
      %672 = vmatprep.subr.mxu0 0.0
      %673 = vmatpush1.msra.mxu0 0.0
      %674 = vmatprep.subr.mxu0 0.0
      %675 = vmatpush1.msra.mxu0 0.0
      %676 = vmatprep.subr.mxu0 0.0
      %677 = vmatpush1.msra.mxu0 0.0
      %678 = vmatprep.subr.mxu0 0.0
      %679 = vmatpush1.msra.mxu0 0.0
      %680 = vmatprep.subr.mxu0 0.0
      %681 = vmatpush1.msra.mxu0 0.0
      %682 = vmatprep.subr.mxu0 0.0
      %683 = vmatpush1.msra.mxu0 0.0
      %684 = vmatprep.subr.mxu0 0.0
      %685 = vmatpush1.msra.mxu0 0.0
      %686 = vmatprep.subr.mxu0 0.0
      %687 = vmatpush1.msra.mxu0 0.0
      %688 = vmatprep.subr.mxu0 0.0
      %689 = vmatpush1.msra.mxu0 0.0
      %690 = vmatprep.subr.mxu0 0.0
      %691 = vmatpush1.msra.mxu0 0.0
      %692 = vmatprep.mubr.f32.mxu0 0.0
      %693 = vmatmul.mubr.f32.gmra.mrb[0].mxu0 %v623
      %v694 = vpop.f32.mrb[0].mxu0
      %v695 = vadd.f32 0.0, %v694
      %v696 = vpop.f32.mrb[0].mxu0
      %697 = vdwg.mxu0
      %v698 = vadd.f32 %v538, %v695
      %v699 = vstv %s206
      %v700 = vadd.f32 %v698, %v699
      %v701 = vmax.f32 %v700, 0.0
      %703 = vrot.lane.b32.xlu0 %v701, 125
      %v704 = vpop.permute.xlu0 %703
      %v706 = vmax.f32 %v701, %v704
      %v707 = vadd.s32 %v225, 3
      %vm708 = vcmp.eq.s32.totalorder %v224, %v707
      %v709 = vsel %vm708, 1, 0
      %v710 = vcvt.s32.f32 %v709
      %v712 = vsel %vm229, %v710, 0
      %714 = vmatprep.subr.mxu0 0.0
      %715 = vmatpush1.msra.mxu0 %v220
      %716 = vmatprep.subr.mxu0 0.0
      %717 = vmatpush1.msra.mxu0 %v221
      %718 = vmatprep.subr.mxu0 0.0
      %719 = vmatpush1.msra.mxu0 %v222
      %720 = vmatprep.subr.mxu0 0.0
      %721 = vmatpush1.msra.mxu0 0.0
      %722 = vmatprep.subr.mxu0 0.0
      %723 = vmatpush1.msra.mxu0 0.0
      %724 = vmatprep.subr.mxu0 0.0
      %725 = vmatpush1.msra.mxu0 0.0
      %726 = vmatprep.subr.mxu0 0.0
      %727 = vmatpush1.msra.mxu0 0.0
      %728 = vmatprep.subr.mxu0 0.0
      %729 = vmatpush1.msra.mxu0 0.0
      %730 = vmatprep.subr.mxu0 0.0
      %731 = vmatpush1.msra.mxu0 0.0
      %732 = vmatprep.subr.mxu0 0.0
      %733 = vmatpush1.msra.mxu0 0.0
      %734 = vmatprep.subr.mxu0 0.0
      %735 = vmatpush1.msra.mxu0 0.0
      %736 = vmatprep.subr.mxu0 0.0
      %737 = vmatpush1.msra.mxu0 0.0
      %738 = vmatprep.subr.mxu0 0.0
      %739 = vmatpush1.msra.mxu0 0.0
      %740 = vmatprep.subr.mxu0 0.0
      %741 = vmatpush1.msra.mxu0 0.0
      %742 = vmatprep.subr.mxu0 0.0
      %743 = vmatpush1.msra.mxu0 0.0
      %744 = vmatprep.subr.mxu0 0.0
      %745 = vmatpush1.msra.mxu0 0.0
      %746 = vmatprep.subr.mxu0 0.0
      %747 = vmatpush1.msra.mxu0 0.0
      %748 = vmatprep.subr.mxu0 0.0
      %749 = vmatpush1.msra.mxu0 0.0
      %750 = vmatprep.subr.mxu0 0.0
      %751 = vmatpush1.msra.mxu0 0.0
      %752 = vmatprep.subr.mxu0 0.0
      %753 = vmatpush1.msra.mxu0 0.0
      %754 = vmatprep.subr.mxu0 0.0
      %755 = vmatpush1.msra.mxu0 0.0
      %756 = vmatprep.subr.mxu0 0.0
      %757 = vmatpush1.msra.mxu0 0.0
      %758 = vmatprep.subr.mxu0 0.0
      %759 = vmatpush1.msra.mxu0 0.0
      %760 = vmatprep.subr.mxu0 0.0
      %761 = vmatpush1.msra.mxu0 0.0
      %762 = vmatprep.subr.mxu0 0.0
      %763 = vmatpush1.msra.mxu0 0.0
      %764 = vmatprep.subr.mxu0 0.0
      %765 = vmatpush1.msra.mxu0 0.0
      %766 = vmatprep.subr.mxu0 0.0
      %767 = vmatpush1.msra.mxu0 0.0
      %768 = vmatprep.subr.mxu0 0.0
      %769 = vmatpush1.msra.mxu0 0.0
      %770 = vmatprep.subr.mxu0 0.0
      %771 = vmatpush1.msra.mxu0 0.0
      %772 = vmatprep.subr.mxu0 0.0
      %773 = vmatpush1.msra.mxu0 0.0
      %774 = vmatprep.subr.mxu0 0.0
      %775 = vmatpush1.msra.mxu0 0.0
      %776 = vmatprep.subr.mxu0 0.0
      %777 = vmatpush1.msra.mxu0 0.0
      %778 = vmatprep.mubr.f32.mxu0 0.0
      %779 = vmatmul.mubr.f32.gmra.mrb[0].mxu0 %v712
      %v780 = vpop.f32.mrb[0].mxu0
      %v781 = vadd.f32 0.0, %v780
      %v782 = vpop.f32.mrb[0].mxu0
      %783 = vdwg.mxu0
      %v784 = vadd.s32 %v225, 4
      %vm785 = vcmp.eq.s32.totalorder %v224, %v784
      %v786 = vsel %vm785, 1, 0
      %v787 = vcvt.s32.f32 %v786
      %v789 = vsel %vm229, %v787, 0
      %791 = vmatprep.subr.mxu0 0.0
      %792 = vmatpush1.msra.mxu0 %v220
      %793 = vmatprep.subr.mxu0 0.0
      %794 = vmatpush1.msra.mxu0 %v221
      %795 = vmatprep.subr.mxu0 0.0
      %796 = vmatpush1.msra.mxu0 %v222
      %797 = vmatprep.subr.mxu0 0.0
      %798 = vmatpush1.msra.mxu0 0.0
      %799 = vmatprep.subr.mxu0 0.0
      %800 = vmatpush1.msra.mxu0 0.0
      %801 = vmatprep.subr.mxu0 0.0
      %802 = vmatpush1.msra.mxu0 0.0
      %803 = vmatprep.subr.mxu0 0.0
      %804 = vmatpush1.msra.mxu0 0.0
      %805 = vmatprep.subr.mxu0 0.0
      %806 = vmatpush1.msra.mxu0 0.0
      %807 = vmatprep.subr.mxu0 0.0
      %808 = vmatpush1.msra.mxu0 0.0
      %809 = vmatprep.subr.mxu0 0.0
      %810 = vmatpush1.msra.mxu0 0.0
      %811 = vmatprep.subr.mxu0 0.0
      %812 = vmatpush1.msra.mxu0 0.0
      %813 = vmatprep.subr.mxu0 0.0
      %814 = vmatpush1.msra.mxu0 0.0
      %815 = vmatprep.subr.mxu0 0.0
      %816 = vmatpush1.msra.mxu0 0.0
      %817 = vmatprep.subr.mxu0 0.0
      %818 = vmatpush1.msra.mxu0 0.0
      %819 = vmatprep.subr.mxu0 0.0
      %820 = vmatpush1.msra.mxu0 0.0
      %821 = vmatprep.subr.mxu0 0.0
      %822 = vmatpush1.msra.mxu0 0.0
      %823 = vmatprep.subr.mxu0 0.0
      %824 = vmatpush1.msra.mxu0 0.0
      %825 = vmatprep.subr.mxu0 0.0
      %826 = vmatpush1.msra.mxu0 0.0
      %827 = vmatprep.subr.mxu0 0.0
      %828 = vmatpush1.msra.mxu0 0.0
      %829 = vmatprep.subr.mxu0 0.0
      %830 = vmatpush1.msra.mxu0 0.0
      %831 = vmatprep.subr.mxu0 0.0
      %832 = vmatpush1.msra.mxu0 0.0
      %833 = vmatprep.subr.mxu0 0.0
      %834 = vmatpush1.msra.mxu0 0.0
      %835 = vmatprep.subr.mxu0 0.0
      %836 = vmatpush1.msra.mxu0 0.0
      %837 = vmatprep.subr.mxu0 0.0
      %838 = vmatpush1.msra.mxu0 0.0
      %839 = vmatprep.subr.mxu0 0.0
      %840 = vmatpush1.msra.mxu0 0.0
      %841 = vmatprep.subr.mxu0 0.0
      %842 = vmatpush1.msra.mxu0 0.0
      %843 = vmatprep.subr.mxu0 0.0
      %844 = vmatpush1.msra.mxu0 0.0
      %845 = vmatprep.subr.mxu0 0.0
      %846 = vmatpush1.msra.mxu0 0.0
      %847 = vmatprep.subr.mxu0 0.0
      %848 = vmatpush1.msra.mxu0 0.0
      %849 = vmatprep.subr.mxu0 0.0
      %850 = vmatpush1.msra.mxu0 0.0
      %851 = vmatprep.subr.mxu0 0.0
      %852 = vmatpush1.msra.mxu0 0.0
      %853 = vmatprep.subr.mxu0 0.0
      %854 = vmatpush1.msra.mxu0 0.0
      %855 = vmatprep.mubr.f32.mxu0 0.0
      %856 = vmatmul.mubr.f32.gmra.mrb[0].mxu0 %v789
      %v857 = vpop.f32.mrb[0].mxu0
      %v858 = vadd.f32 0.0, %v857
      %v859 = vpop.f32.mrb[0].mxu0
      %860 = vdwg.mxu0
      %v862 = vsel %vm387, %v858, 0
      %864 = vmatprep.subr.mxu0 0.0
      %865 = vmatpush1.msra.mxu0 %v384
      %866 = vmatprep.subr.mxu0 0.0
      %867 = vmatpush1.msra.mxu0 %v385
      %868 = vmatprep.subr.mxu0 0.0
      %869 = vmatpush1.msra.mxu0 %v393
      %870 = vmatprep.subr.mxu0 0.0
      %871 = vmatpush1.msra.mxu0 0.0
      %872 = vmatprep.subr.mxu0 0.0
      %873 = vmatpush1.msra.mxu0 0.0
      %874 = vmatprep.subr.mxu0 0.0
      %875 = vmatpush1.msra.mxu0 0.0
      %876 = vmatprep.subr.mxu0 0.0
      %877 = vmatpush1.msra.mxu0 0.0
      %878 = vmatprep.subr.mxu0 0.0
      %879 = vmatpush1.msra.mxu0 0.0
      %880 = vmatprep.subr.mxu0 0.0
      %881 = vmatpush1.msra.mxu0 0.0
      %882 = vmatprep.subr.mxu0 0.0
      %883 = vmatpush1.msra.mxu0 0.0
      %884 = vmatprep.subr.mxu0 0.0
      %885 = vmatpush1.msra.mxu0 0.0
      %886 = vmatprep.subr.mxu0 0.0
      %887 = vmatpush1.msra.mxu0 0.0
      %888 = vmatprep.subr.mxu0 0.0
      %889 = vmatpush1.msra.mxu0 0.0
      %890 = vmatprep.subr.mxu0 0.0
      %891 = vmatpush1.msra.mxu0 0.0
      %892 = vmatprep.subr.mxu0 0.0
      %893 = vmatpush1.msra.mxu0 0.0
      %894 = vmatprep.subr.mxu0 0.0
      %895 = vmatpush1.msra.mxu0 0.0
      %896 = vmatprep.subr.mxu0 0.0
      %897 = vmatpush1.msra.mxu0 0.0
      %898 = vmatprep.subr.mxu0 0.0
      %899 = vmatpush1.msra.mxu0 0.0
      %900 = vmatprep.subr.mxu0 0.0
      %901 = vmatpush1.msra.mxu0 0.0
      %902 = vmatprep.subr.mxu0 0.0
      %903 = vmatpush1.msra.mxu0 0.0
      %904 = vmatprep.subr.mxu0 0.0
      %905 = vmatpush1.msra.mxu0 0.0
      %906 = vmatprep.subr.mxu0 0.0
      %907 = vmatpush1.msra.mxu0 0.0
      %908 = vmatprep.subr.mxu0 0.0
      %909 = vmatpush1.msra.mxu0 0.0
      %910 = vmatprep.subr.mxu0 0.0
      %911 = vmatpush1.msra.mxu0 0.0
      %912 = vmatprep.subr.mxu0 0.0
      %913 = vmatpush1.msra.mxu0 0.0
      %914 = vmatprep.subr.mxu0 0.0
      %915 = vmatpush1.msra.mxu0 0.0
      %916 = vmatprep.subr.mxu0 0.0
      %917 = vmatpush1.msra.mxu0 0.0
      %918 = vmatprep.subr.mxu0 0.0
      %919 = vmatpush1.msra.mxu0 0.0
      %920 = vmatprep.subr.mxu0 0.0
      %921 = vmatpush1.msra.mxu0 0.0
      %922 = vmatprep.subr.mxu0 0.0
      %923 = vmatpush1.msra.mxu0 0.0
      %924 = vmatprep.subr.mxu0 0.0
      %925 = vmatpush1.msra.mxu0 0.0
      %926 = vmatprep.subr.mxu0 0.0
      %927 = vmatpush1.msra.mxu0 0.0
      %928 = vmatprep.mubr.f32.mxu0 0.0
      %929 = vmatmul.mubr.f32.gmra.mrb[0].mxu0 %v862
      %v930 = vpop.f32.mrb[0].mxu0
      %v931 = vadd.f32 0.0, %v930
      %v932 = vpop.f32.mrb[0].mxu0
      %933 = vdwg.mxu0
      %v935 = vsel %vm387, %v781, 0
      %937 = vmatprep.subr.mxu0 0.0
      %938 = vmatpush1.msra.mxu0 %v303
      %939 = vmatprep.subr.mxu0 0.0
      %940 = vmatpush1.msra.mxu0 %v304
      %941 = vmatprep.subr.mxu0 0.0
      %942 = vmatpush1.msra.mxu0 %v469
      %943 = vmatprep.subr.mxu0 0.0
      %944 = vmatpush1.msra.mxu0 0.0
      %945 = vmatprep.subr.mxu0 0.0
      %946 = vmatpush1.msra.mxu0 0.0
      %947 = vmatprep.subr.mxu0 0.0
      %948 = vmatpush1.msra.mxu0 0.0
      %949 = vmatprep.subr.mxu0 0.0
      %950 = vmatpush1.msra.mxu0 0.0
      %951 = vmatprep.subr.mxu0 0.0
      %952 = vmatpush1.msra.mxu0 0.0
      %953 = vmatprep.subr.mxu0 0.0
      %954 = vmatpush1.msra.mxu0 0.0
      %955 = vmatprep.subr.mxu0 0.0
      %956 = vmatpush1.msra.mxu0 0.0
      %957 = vmatprep.subr.mxu0 0.0
      %958 = vmatpush1.msra.mxu0 0.0
      %959 = vmatprep.subr.mxu0 0.0
      %960 = vmatpush1.msra.mxu0 0.0
      %961 = vmatprep.subr.mxu0 0.0
      %962 = vmatpush1.msra.mxu0 0.0
      %963 = vmatprep.subr.mxu0 0.0
      %964 = vmatpush1.msra.mxu0 0.0
      %965 = vmatprep.subr.mxu0 0.0
      %966 = vmatpush1.msra.mxu0 0.0
      %967 = vmatprep.subr.mxu0 0.0
      %968 = vmatpush1.msra.mxu0 0.0
      %969 = vmatprep.subr.mxu0 0.0
      %970 = vmatpush1.msra.mxu0 0.0
      %971 = vmatprep.subr.mxu0 0.0
      %972 = vmatpush1.msra.mxu0 0.0
      %973 = vmatprep.subr.mxu0 0.0
      %974 = vmatpush1.msra.mxu0 0.0
      %975 = vmatprep.subr.mxu0 0.0
      %976 = vmatpush1.msra.mxu0 0.0
      %977 = vmatprep.subr.mxu0 0.0
      %978 = vmatpush1.msra.mxu0 0.0
      %979 = vmatprep.subr.mxu0 0.0
      %980 = vmatpush1.msra.mxu0 0.0
      %981 = vmatprep.subr.mxu0 0.0
      %982 = vmatpush1.msra.mxu0 0.0
      %983 = vmatprep.subr.mxu0 0.0
      %984 = vmatpush1.msra.mxu0 0.0
      %985 = vmatprep.subr.mxu0 0.0
      %986 = vmatpush1.msra.mxu0 0.0
      %987 = vmatprep.subr.mxu0 0.0
      %988 = vmatpush1.msra.mxu0 0.0
      %989 = vmatprep.subr.mxu0 0.0
      %990 = vmatpush1.msra.mxu0 0.0
      %991 = vmatprep.subr.mxu0 0.0
      %992 = vmatpush1.msra.mxu0 0.0
      %993 = vmatprep.subr.mxu0 0.0
      %994 = vmatpush1.msra.mxu0 0.0
      %995 = vmatprep.subr.mxu0 0.0
      %996 = vmatpush1.msra.mxu0 0.0
      %997 = vmatprep.subr.mxu0 0.0
      %998 = vmatpush1.msra.mxu0 0.0
      %999 = vmatprep.subr.mxu0 0.0
      %1000 = vmatpush1.msra.mxu0 0.0
      %1001 = vmatprep.mubr.f32.mxu0 0.0
      %1002 = vmatmul.mubr.f32.gmra.mrb[0].mxu0 %v935
      %v1003 = vpop.f32.mrb[0].mxu0
      %v1004 = vadd.f32 %v931, %v1003
      %v1005 = vpop.f32.mrb[0].mxu0
      %1006 = vdwg.mxu0
      %v1007 = vadd.s32 %v225, 5
      %vm1008 = vcmp.eq.s32.totalorder %v224, %v1007
      %v1009 = vsel %vm1008, 1, 0
      %v1010 = vcvt.s32.f32 %v1009
      %v1012 = vsel %vm229, %v1010, 0
      %1014 = vmatprep.subr.mxu0 0.0
      %1015 = vmatpush1.msra.mxu0 %v220
      %1016 = vmatprep.subr.mxu0 0.0
      %1017 = vmatpush1.msra.mxu0 %v221
      %1018 = vmatprep.subr.mxu0 0.0
      %1019 = vmatpush1.msra.mxu0 %v222
      %1020 = vmatprep.subr.mxu0 0.0
      %1021 = vmatpush1.msra.mxu0 0.0
      %1022 = vmatprep.subr.mxu0 0.0
      %1023 = vmatpush1.msra.mxu0 0.0
      %1024 = vmatprep.subr.mxu0 0.0
      %1025 = vmatpush1.msra.mxu0 0.0
      %1026 = vmatprep.subr.mxu0 0.0
      %1027 = vmatpush1.msra.mxu0 0.0
      %1028 = vmatprep.subr.mxu0 0.0
      %1029 = vmatpush1.msra.mxu0 0.0
      %1030 = vmatprep.subr.mxu0 0.0
      %1031 = vmatpush1.msra.mxu0 0.0
      %1032 = vmatprep.subr.mxu0 0.0
      %1033 = vmatpush1.msra.mxu0 0.0
      %1034 = vmatprep.subr.mxu0 0.0
      %1035 = vmatpush1.msra.mxu0 0.0
      %1036 = vmatprep.subr.mxu0 0.0
      %1037 = vmatpush1.msra.mxu0 0.0
      %1038 = vmatprep.subr.mxu0 0.0
      %1039 = vmatpush1.msra.mxu0 0.0
      %1040 = vmatprep.subr.mxu0 0.0
      %1041 = vmatpush1.msra.mxu0 0.0
      %1042 = vmatprep.subr.mxu0 0.0
      %1043 = vmatpush1.msra.mxu0 0.0
      %1044 = vmatprep.subr.mxu0 0.0
      %1045 = vmatpush1.msra.mxu0 0.0
      %1046 = vmatprep.subr.mxu0 0.0
      %1047 = vmatpush1.msra.mxu0 0.0
      %1048 = vmatprep.subr.mxu0 0.0
      %1049 = vmatpush1.msra.mxu0 0.0
      %1050 = vmatprep.subr.mxu0 0.0
      %1051 = vmatpush1.msra.mxu0 0.0
      %1052 = vmatprep.subr.mxu0 0.0
      %1053 = vmatpush1.msra.mxu0 0.0
      %1054 = vmatprep.subr.mxu0 0.0
      %1055 = vmatpush1.msra.mxu0 0.0
      %1056 = vmatprep.subr.mxu0 0.0
      %1057 = vmatpush1.msra.mxu0 0.0
      %1058 = vmatprep.subr.mxu0 0.0
      %1059 = vmatpush1.msra.mxu0 0.0
      %1060 = vmatprep.subr.mxu0 0.0
      %1061 = vmatpush1.msra.mxu0 0.0
      %1062 = vmatprep.subr.mxu0 0.0
      %1063 = vmatpush1.msra.mxu0 0.0
      %1064 = vmatprep.subr.mxu0 0.0
      %1065 = vmatpush1.msra.mxu0 0.0
      %1066 = vmatprep.subr.mxu0 0.0
      %1067 = vmatpush1.msra.mxu0 0.0
      %1068 = vmatprep.subr.mxu0 0.0
      %1069 = vmatpush1.msra.mxu0 0.0
      %1070 = vmatprep.subr.mxu0 0.0
      %1071 = vmatpush1.msra.mxu0 0.0
      %1072 = vmatprep.subr.mxu0 0.0
      %1073 = vmatpush1.msra.mxu0 0.0
      %1074 = vmatprep.subr.mxu0 0.0
      %1075 = vmatpush1.msra.mxu0 0.0
      %1076 = vmatprep.subr.mxu0 0.0
      %1077 = vmatpush1.msra.mxu0 0.0
      %1078 = vmatprep.mubr.f32.mxu0 0.0
      %1079 = vmatmul.mubr.f32.gmra.mrb[0].mxu0 %v1012
      %v1080 = vpop.f32.mrb[0].mxu0
      %v1081 = vadd.f32 0.0, %v1080
      %v1082 = vpop.f32.mrb[0].mxu0
      %1083 = vdwg.mxu0
      %v1085 = vsel %vm387, %v1081, 0
      %1087 = vmatprep.subr.mxu0 0.0
      %1088 = vmatpush1.msra.mxu0 %v619
      %1089 = vmatprep.subr.mxu0 0.0
      %1090 = vmatpush1.msra.mxu0 %v620
      %1091 = vmatprep.subr.mxu0 0.0
      %1092 = vmatpush1.msra.mxu0 %v626
      %1093 = vmatprep.subr.mxu0 0.0
      %1094 = vmatpush1.msra.mxu0 0.0
      %1095 = vmatprep.subr.mxu0 0.0
      %1096 = vmatpush1.msra.mxu0 0.0
      %1097 = vmatprep.subr.mxu0 0.0
      %1098 = vmatpush1.msra.mxu0 0.0
      %1099 = vmatprep.subr.mxu0 0.0
      %1100 = vmatpush1.msra.mxu0 0.0
      %1101 = vmatprep.subr.mxu0 0.0
      %1102 = vmatpush1.msra.mxu0 0.0
      %1103 = vmatprep.subr.mxu0 0.0
      %1104 = vmatpush1.msra.mxu0 0.0
      %1105 = vmatprep.subr.mxu0 0.0
      %1106 = vmatpush1.msra.mxu0 0.0
      %1107 = vmatprep.subr.mxu0 0.0
      %1108 = vmatpush1.msra.mxu0 0.0
      %1109 = vmatprep.subr.mxu0 0.0
      %1110 = vmatpush1.msra.mxu0 0.0
      %1111 = vmatprep.subr.mxu0 0.0
      %1112 = vmatpush1.msra.mxu0 0.0
      %1113 = vmatprep.subr.mxu0 0.0
      %1114 = vmatpush1.msra.mxu0 0.0
      %1115 = vmatprep.subr.mxu0 0.0
      %1116 = vmatpush1.msra.mxu0 0.0
      %1117 = vmatprep.subr.mxu0 0.0
      %1118 = vmatpush1.msra.mxu0 0.0
      %1119 = vmatprep.subr.mxu0 0.0
      %1120 = vmatpush1.msra.mxu0 0.0
      %1121 = vmatprep.subr.mxu0 0.0
      %1122 = vmatpush1.msra.mxu0 0.0
      %1123 = vmatprep.subr.mxu0 0.0
      %1124 = vmatpush1.msra.mxu0 0.0
      %1125 = vmatprep.subr.mxu0 0.0
      %1126 = vmatpush1.msra.mxu0 0.0
      %1127 = vmatprep.subr.mxu0 0.0
      %1128 = vmatpush1.msra.mxu0 0.0
      %1129 = vmatprep.subr.mxu0 0.0
      %1130 = vmatpush1.msra.mxu0 0.0
      %1131 = vmatprep.subr.mxu0 0.0
      %1132 = vmatpush1.msra.mxu0 0.0
      %1133 = vmatprep.subr.mxu0 0.0
      %1134 = vmatpush1.msra.mxu0 0.0
      %1135 = vmatprep.subr.mxu0 0.0
      %1136 = vmatpush1.msra.mxu0 0.0
      %1137 = vmatprep.subr.mxu0 0.0
      %1138 = vmatpush1.msra.mxu0 0.0
      %1139 = vmatprep.subr.mxu0 0.0
      %1140 = vmatpush1.msra.mxu0 0.0
      %1141 = vmatprep.subr.mxu0 0.0
      %1142 = vmatpush1.msra.mxu0 0.0
      %1143 = vmatprep.subr.mxu0 0.0
      %1144 = vmatpush1.msra.mxu0 0.0
      %1145 = vmatprep.subr.mxu0 0.0
      %1146 = vmatpush1.msra.mxu0 0.0
      %1147 = vmatprep.subr.mxu0 0.0
      %1148 = vmatpush1.msra.mxu0 0.0
      %1149 = vmatprep.subr.mxu0 0.0
      %1150 = vmatpush1.msra.mxu0 0.0
      %1151 = vmatprep.mubr.f32.mxu0 0.0
      %1152 = vmatmul.mubr.f32.gmra.mrb[0].mxu0 %v1085
      %v1153 = vpop.f32.mrb[0].mxu0
      %v1154 = vadd.f32 0.0, %v1153
      %v1155 = vpop.f32.mrb[0].mxu0
      %1156 = vdwg.mxu0
      %v1157 = vadd.f32 %v1004, %v1154
      %v1158 = vadd.f32 %v1157, %v699
      %v1159 = vmax.f32 %v1158, 0.0
      %1161 = vrot.lane.b32.xlu0 %v1159, 125
      %v1162 = vpop.permute.xlu0 %1161
      %v1164 = vmax.f32 %v1159, %v1162
      %v1165 = vmax.f32 %v706, %v1164
      %vm1166 = vcmask 19456
      %1167 = vst.msk [vmem:[%s205] sm:$0xf] %vm1166, %v1165
      %p1168 = scmp.lt.s32.totalorder %s19, 1
      %s1169 = scalar_select %p1168, %s19, 1
      %p1170 = scmp.lt.s32.totalorder %s20, 0
      %s1171 = scalar_select %p1170, %s20, 0
      %s1172 = sadd.s32 %s1171, %s1169
      %s1173 = smul.addr %s1172, 4
      %s1174 = scalar_lea.vmem %s3, %s1173
      // Predicated region
      $region33: #{tpu_custom_call.1} parent=31 // pred_check
        %p1175 = pneg %p117
      $region34: #{tpu_custom_call.1} parent=31 // pred_check_branch
        %1177 = sbr.rel (%p1175) target = $region36
      $region35: #{tpu_custom_call.1} parent=31 // pred_region
        _
      $region36: #{tpu_custom_call.1} parent=31 // pred_fallthru
        _
    $region32: #{tpu_custom_call.1} parent=5 // pred_fallthru
      _
    %p1178 = scmp.le.s32.totalorder 2, %s10
    // Predicated region
    $region37: #{tpu_custom_call.1} parent=5 // pred_check
      %p1179 = pneg %p1178
    $region38: #{tpu_custom_call.1} parent=5 // pred_check_branch
      %1181 = sbr.rel (%p1179) target = $region40
    $region39: #{tpu_custom_call.1} parent=5 // pred_region
      %s1182 = ssub.s32 %s10, 2
      // Predicated region
      $region41: #{tpu_custom_call.1} parent=39 // pred_check
        %p1183 = pneg %p123
      $region42: #{tpu_custom_call.1} parent=39 // pred_check_branch
        %1185 = sbr.rel (%p1183) target = $region44
      $region43: #{tpu_custom_call.1} parent=39 // pred_region
        %p1186 = scmp.lt.s32.totalorder %s21, 1
        %s1187 = scalar_select %p1186, %s21, 1
        %p1188 = scmp.lt.s32.totalorder %s22, 0
        %s1189 = scalar_select %p1188, %s22, 0
        %s1190 = sadd.s32 %s1189, %s1187
        %s1191 = smul.addr %s1190, 4
        %s1192 = scalar_lea.vmem %s3, %s1191
      $region44: #{tpu_custom_call.1} parent=39 // pred_fallthru
        _
    $region40: #{tpu_custom_call.1} parent=5 // pred_fallthru
      _
  $region6: #{tpu_custom_call.1} parent=0 // loop_footer
    %s14 = sadd.s32 1, %s10
  $region7: #{tpu_custom_call.1} parent=0 // loop_footer_branch
    %9 = sbr.rel target = $region3
  $region8: #{tpu_custom_call.1} parent=0 // loop_exit
    _

</llo_original>
